<compile_context>
chip_gen: v6e
topology: v6e:2x2x1
jax: 0.10.0
libtpu: 0.0.40
codegen_flags: <defaults>
</compile_context>

<pallas_src>
import jax
import jax.numpy as jnp
from jax.experimental import pallas as pl
from jax.experimental.pallas import tpu as pltpu


# ---------------------------------------------------------------------------
# Config (stands in for `cfg` in the PyTorch code) — small, deterministic.
# ---------------------------------------------------------------------------
N_EMB = 16          # cfg.n_emb
DIM_ENV_EMB = 6     # cfg.dim_env_emb
INPUT_CH_UV = 2     # input_ch_uv
W = 256             # hidden width (PyTorch default)
OUT_DIM = 3
IN_PAD = 32         # padded layer-0 K (2 uv + 16 one-hot + 14 zero lanes)
OUT_ROWS = 8        # padded transposed-output rows (3 real + 5 zero)


# ---------------------------------------------------------------------------
# Pallas kernel: fused embedding + full MLP for one row-tile.
# ---------------------------------------------------------------------------
def _envnet_kernel(x_ref, ids_ref,
                   w0_ref, b0_ref,
                   w123_ref, b123_ref,
                   w4t_ref, b4t_ref,
                   o_ref):
    tile = x_ref.shape[0]

    x = x_ref[...]                                   # (tile, 2) f32
    ids = ids_ref[...]                               # (tile, 1) int32

    # ---- fused layer-0 LHS: lanes 0-1 = x, lanes 2-17 = one-hot(emb_id) ----
    # Built with iota + select only (no concat/pad ops inside the kernel).
    lane = jax.lax.broadcasted_iota(jnp.int32, (tile, IN_PAD), 1)
    lhs = jnp.zeros((tile, IN_PAD), jnp.float32)
    for c in range(INPUT_CH_UV):                     # unrolled at trace time
        lhs = lhs + jnp.where(lane == c, x[:, c:c + 1], 0.0)
    # ids in [0, N_EMB); lanes outside [2, 18) can never match -> zero there.
    lhs = lhs + (lane - INPUT_CH_UV == ids).astype(jnp.float32)

    # Layer 0: single K=32 matmul (f32; tiny relative to the W x W layers).
    h = jnp.dot(lhs, w0_ref[...], preferred_element_type=jnp.float32) + b0_ref[...]
    h = jnp.maximum(h, 0.0)

    # Layers 1-3: Linear(W, W) + ReLU, bf16 operands into the MXU, f32 accum.
    # (Optional: int8 weights on v5e/v6e or fp8 on v7x for ~2x MXU throughput.)
    for li in range(3):                              # unrolled at trace time
        h = jnp.dot(h.astype(jnp.bfloat16), w123_ref[li],
                    preferred_element_type=jnp.float32) + b123_ref[li]
        h = jnp.maximum(h, 0.0)

    # Layer 4 (transposed): z^T (8, tile) = w4^T_pad (8, W) · h^T, computed as
    # a last-dim-contraction dot_general (same pattern as q @ k^T).
    zt = jax.lax.dot_general(
        w4t_ref[...], h.astype(jnp.bfloat16),
        dimension_numbers=(((1,), (1,)), ((), ())),
        preferred_element_type=jnp.float32)          # (8, tile)
    zt = zt + b4t_ref[...]                           # (8, 1) lane-broadcast

    # Sigmoid: clip avoids exp overflow; reciprocal runs on the EUP slot.
    zt = jnp.clip(zt, -30.0, 30.0)
    o_ref[...] = pl.reciprocal(1.0 + jnp.exp(-zt), approx=True).astype(o_ref.dtype)


# ---------------------------------------------------------------------------
# One-time parameter packing (hoisted out of the forward path).
# ---------------------------------------------------------------------------
def prepare_params(params):
    w0 = params["w0"].astype(jnp.float32)                        # (18, W)
    emb_fold = params["emb_table"].astype(jnp.float32) @ w0[INPUT_CH_UV:]  # (16, W)

    # Fused, padded layer-0 weight: rows 0-1 = w0[:2], rows 2-17 = emb fold.
    w0cat = (jnp.zeros((IN_PAD, W), jnp.float32)
             .at[:INPUT_CH_UV].set(w0[:INPUT_CH_UV])
             .at[INPUT_CH_UV:INPUT_CH_UV + N_EMB].set(emb_fold))
    b0 = params["b0"].astype(jnp.float32)                        # (1, W)

    w123 = jnp.stack([params["w1"], params["w2"], params["w3"]]
                     ).astype(jnp.bfloat16)                      # (3, W, W)
    b123 = jnp.stack([params["b1"], params["b2"], params["b3"]]
                     ).astype(jnp.float32)                       # (3, 1, W)

    # Transposed, row-padded final layer: (8, W) bf16 and (8, 1) f32 bias.
    w4t = (jnp.zeros((OUT_ROWS, W), jnp.float32)
           .at[:OUT_DIM].set(params["w4"].T)).astype(jnp.bfloat16)
    b4t = jnp.zeros((OUT_ROWS, 1), jnp.float32).at[:OUT_DIM, 0].set(params["b4"][0])

    return {"w0": w0cat, "b0": b0, "w123": w123, "b123": b123,
            "w4t": w4t, "b4t": b4t}


# ---------------------------------------------------------------------------
# Row-tile selection: big tiles for large N (amortize per-step overhead),
# smaller tiles for small N so there are several grid steps (v7x megacore).
# ---------------------------------------------------------------------------
def _choose_tile_n(n, *, max_tile=2048, min_tile=256, target_steps=8):
    tile = max_tile
    while tile > min_tile and (n + tile - 1) // tile < target_steps:
        tile //= 2
    return tile


# ---------------------------------------------------------------------------
# Wrapper: row padding + pallas_call. Expects packed params from prepare_params.
# ---------------------------------------------------------------------------
def envnet_forward(x, emb_id, packed, *, tile_n=None):
    """x: [N, INPUT_CH_UV] f32, emb_id: [N] int32. Returns [N, 3] f32."""
    n = x.shape[0]
    if tile_n is None:
        tile_n = _choose_tile_n(n)

    # Pad rows to a multiple of tile_n (handles arbitrary N).
    n_pad = ((n + tile_n - 1) // tile_n) * tile_n
    pad = n_pad - n
    x_p = jnp.pad(x.astype(jnp.float32), ((0, pad), (0, 0)))
    ids_p = jnp.pad(emb_id.astype(jnp.int32), ((0, pad),)).reshape(n_pad, 1)

    grid = (n_pad // tile_n,)

    def const_spec(arr):
        nd = arr.ndim
        return pl.BlockSpec(arr.shape, lambda i, _nd=nd: (0,) * _nd)

    in_specs = [
        pl.BlockSpec((tile_n, INPUT_CH_UV), lambda i: (i, 0)),   # x tile
        pl.BlockSpec((tile_n, 1), lambda i: (i, 0)),             # emb_id tile
        const_spec(packed["w0"]), const_spec(packed["b0"]),
        const_spec(packed["w123"]), const_spec(packed["b123"]),
        const_spec(packed["w4t"]), const_spec(packed["b4t"]),
    ]
    # Transposed lane-dense output: (8, n_pad) f32, per-step (8, tile_n) block.
    out_spec = pl.BlockSpec((OUT_ROWS, tile_n), lambda i: (0, i))

    out = pl.pallas_call(
        _envnet_kernel,
        out_shape=jax.ShapeDtypeStruct((OUT_ROWS, n_pad), jnp.float32),
        grid_spec=pltpu.PrefetchScalarGridSpec(
            num_scalar_prefetch=0,
            grid=grid,
            in_specs=in_specs,
            out_specs=out_spec,
        ),
        compiler_params=pltpu.CompilerParams(
            dimension_semantics=("parallel",),
            vmem_limit_bytes=32 * 1024 * 1024,
        ),
    )(x_p, ids_p, packed["w0"], packed["b0"], packed["w123"], packed["b123"],
      packed["w4t"], packed["b4t"])

    return out[:OUT_DIM, :n].T


# ---------------------------------------------------------------------------
# Deterministic parameter init (synthetic; shapes from the module __init__).
# ---------------------------------------------------------------------------
def init_params(key):
    in_dim = INPUT_CH_UV + DIM_ENV_EMB
    dims = [(in_dim, W), (W, W), (W, W), (W, W), (W, OUT_DIM)]
    keys = jax.random.split(key, 2 * len(dims) + 1)
    params = {"emb_table": jax.random.normal(keys[0], (N_EMB, DIM_ENV_EMB),
                                             dtype=jnp.float32)}
    for li, (d_in, d_out) in enumerate(dims):
        scale = 1.0 / jnp.sqrt(jnp.float32(d_in))
        params[f"w{li}"] = scale * jax.random.normal(
            keys[1 + 2 * li], (d_in, d_out), dtype=jnp.float32)
        params[f"b{li}"] = scale * jax.random.normal(
            keys[2 + 2 * li], (1, d_out), dtype=jnp.float32)
    return params


# ---------------------------------------------------------------------------
# Pure-JAX f32 reference (literal gather + concat + MLP) for correctness check.
# ---------------------------------------------------------------------------
def envnet_reference(x, emb_id, params):
    emb = jnp.take(params["emb_table"], emb_id, axis=0)
    h = jnp.concatenate([x, emb], axis=-1).astype(jnp.float32)
    for li in range(4):
        h = jnp.maximum(h @ params[f"w{li}"] + params[f"b{li}"], 0.0)
    z = h @ params["w4"] + params["b4"]
    return jax.nn.sigmoid(z)


if __name__ == "__main__":
    key = jax.random.PRNGKey(0)
    k_param, k_x, k_id = jax.random.split(key, 3)

    params = init_params(k_param)
    packed = prepare_params(params)   # one-time packing, hoisted out of forward

    N = 1000  # non-multiple of the tile: exercises row padding (tile=256 -> 4 grid steps)
    x = jax.random.uniform(k_x, (N, INPUT_CH_UV), dtype=jnp.float32)
    emb_id = jax.random.randint(k_id, (N,), 0, N_EMB, dtype=jnp.int32)

    out = envnet_forward(x, emb_id, packed)
    out = jax.block_until_ready(out)

    ref = envnet_reference(x, emb_id, params)
    assert out.shape == (N, OUT_DIM)
    # bf16 weights (f32 accumulation) + approx reciprocal vs. pure-f32 reference.
    assert jnp.allclose(out, ref, atol=2e-2, rtol=2e-2), "mismatch vs JAX reference"

    print("KERNEL_OK")
</pallas_src>

<mosaic_0001>
module attributes {stable_mosaic.version = 11 : i64} {
  func.func @_envnet_kernel(%arg0: i32, %arg1: memref<256x2xf32, #tpu.memory_space<vmem>>, %arg2: memref<256x1xi32, #tpu.memory_space<vmem>>, %arg3: memref<32x256xf32, #tpu.memory_space<vmem>>, %arg4: memref<1x256xf32, #tpu.memory_space<vmem>>, %arg5: memref<3x256x256xbf16, #tpu.memory_space<vmem>>, %arg6: memref<3x1x256xf32, #tpu.memory_space<vmem>>, %arg7: memref<8x256xbf16, #tpu.memory_space<vmem>>, %arg8: memref<8x1xf32, #tpu.memory_space<vmem>>, %arg9: memref<8x256xf32, #tpu.memory_space<vmem>>) attributes {dimension_semantics = [#tpu.dimension_semantics<parallel>], iteration_bounds = array<i64: 4>, scalar_prefetch = 0 : i64, scratch_operands = 0 : i64, tpu.core_type = #tpu.core_type<tc>, window_params = [{transform_indices = @transform_0, window_bounds = array<i64: 256, 2>}, {transform_indices = @transform_1, window_bounds = array<i64: 256, 1>}, {pipeline_mode = #tpu.pipeline_mode<synchronous>, transform_indices = @transform_2, window_bounds = array<i64: 32, 256>}, {pipeline_mode = #tpu.pipeline_mode<synchronous>, transform_indices = @transform_3, window_bounds = array<i64: 1, 256>}, {pipeline_mode = #tpu.pipeline_mode<synchronous>, transform_indices = @transform_4, window_bounds = array<i64: 3, 256, 256>}, {pipeline_mode = #tpu.pipeline_mode<synchronous>, transform_indices = @transform_5, window_bounds = array<i64: 3, 1, 256>}, {pipeline_mode = #tpu.pipeline_mode<synchronous>, transform_indices = @transform_6, window_bounds = array<i64: 8, 256>}, {pipeline_mode = #tpu.pipeline_mode<synchronous>, transform_indices = @transform_7, window_bounds = array<i64: 8, 1>}, {transform_indices = @transform_8, window_bounds = array<i64: 8, 256>}]} {
    %c0 = arith.constant 0 : index
    %c0_0 = arith.constant 0 : index
    %0 = vector.load %arg1[%c0, %c0_0] : memref<256x2xf32, #tpu.memory_space<vmem>>, vector<256x2xf32>
    %c0_1 = arith.constant 0 : index
    %c0_2 = arith.constant 0 : index
    %1 = vector.load %arg2[%c0_1, %c0_2] : memref<256x1xi32, #tpu.memory_space<vmem>>, vector<256x1xi32>
    %2 = tpu.iota {dimensions = array<i32: 1>} : vector<256x32xi32>
    %cst = arith.constant 0.000000e+00 : f32
    %3 = vector.broadcast %cst : f32 to vector<256x32xf32>
    %c0_i32 = arith.constant 0 : i32
    %4 = vector.broadcast %c0_i32 : i32 to vector<256x32xi32>
    %5 = arith.cmpi eq, %2, %4 : vector<256x32xi32>
    %6 = vector.extract_strided_slice %0 {offsets = [0, 0], sizes = [256, 1], strides = [1, 1]} : vector<256x2xf32> to vector<256x1xf32>
    %cst_3 = arith.constant 0.000000e+00 : f32
    %7 = vector.shape_cast %6 : vector<256x1xf32> to vector<256x1xf32>
    %8 = vector.broadcast %7 : vector<256x1xf32> to vector<256x32xf32>
    %9 = vector.broadcast %cst_3 : f32 to vector<256x32xf32>
    %10 = arith.select %5, %8, %9 : vector<256x32xi1>, vector<256x32xf32>
    %11 = arith.addf %3, %10 : vector<256x32xf32>
    %c1_i32 = arith.constant 1 : i32
    %12 = vector.broadcast %c1_i32 : i32 to vector<256x32xi32>
    %13 = arith.cmpi eq, %2, %12 : vector<256x32xi32>
    %14 = vector.extract_strided_slice %0 {offsets = [0, 1], sizes = [256, 1], strides = [1, 1]} : vector<256x2xf32> to vector<256x1xf32>
    %cst_4 = arith.constant 0.000000e+00 : f32
    %15 = vector.shape_cast %14 : vector<256x1xf32> to vector<256x1xf32>
    %16 = vector.broadcast %15 : vector<256x1xf32> to vector<256x32xf32>
    %17 = vector.broadcast %cst_4 : f32 to vector<256x32xf32>
    %18 = arith.select %13, %16, %17 : vector<256x32xi1>, vector<256x32xf32>
    %19 = arith.addf %11, %18 : vector<256x32xf32>
    %c2_i32 = arith.constant 2 : i32
    %20 = vector.broadcast %c2_i32 : i32 to vector<256x32xi32>
    %21 = arith.subi %2, %20 : vector<256x32xi32>
    %22 = vector.broadcast %1 : vector<256x1xi32> to vector<256x32xi32>
    %23 = arith.cmpi eq, %21, %22 : vector<256x32xi32>
    %24 = arith.extui %23 : vector<256x32xi1> to vector<256x32xi32>
    %25 = arith.sitofp %24 : vector<256x32xi32> to vector<256x32xf32>
    %26 = arith.addf %19, %25 : vector<256x32xf32>
    %c0_5 = arith.constant 0 : index
    %c0_6 = arith.constant 0 : index
    %27 = vector.load %arg3[%c0_5, %c0_6] : memref<32x256xf32, #tpu.memory_space<vmem>>, vector<32x256xf32>
    %cst_7 = arith.constant dense<0.000000e+00> : vector<256x256xf32>
    %28 = tpu.matmul %26, %27, %cst_7 {dimension_numbers = #tpu.dot_dimension_numbers<[1], [0], [0], [1], [0, 0, 1, 1], [], []>} : vector<256x32xf32>, vector<32x256xf32>, vector<256x256xf32> -> vector<256x256xf32>
    %c0_8 = arith.constant 0 : index
    %c0_9 = arith.constant 0 : index
    %29 = vector.load %arg4[%c0_8, %c0_9] : memref<1x256xf32, #tpu.memory_space<vmem>>, vector<1x256xf32>
    %30 = vector.broadcast %29 : vector<1x256xf32> to vector<256x256xf32>
    %31 = arith.addf %28, %30 : vector<256x256xf32>
    %cst_10 = arith.constant 0.000000e+00 : f32
    %32 = vector.broadcast %cst_10 : f32 to vector<256x256xf32>
    %33 = arith.maximumf %31, %32 : vector<256x256xf32>
    %34 = arith.truncf %33 : vector<256x256xf32> to vector<256x256xbf16>
    %c0_11 = arith.constant 0 : index
    %c0_12 = arith.constant 0 : index
    %c0_13 = arith.constant 0 : index
    %35 = vector.load %arg5[%c0_11, %c0_12, %c0_13] : memref<3x256x256xbf16, #tpu.memory_space<vmem>>, vector<1x256x256xbf16>
    %36 = vector.shape_cast %35 : vector<1x256x256xbf16> to vector<256x256xbf16>
    %cst_14 = arith.constant dense<0.000000e+00> : vector<256x256xf32>
    %37 = tpu.matmul %34, %36, %cst_14 {dimension_numbers = #tpu.dot_dimension_numbers<[1], [0], [0], [1], [0, 0, 1, 1], [], []>} : vector<256x256xbf16>, vector<256x256xbf16>, vector<256x256xf32> -> vector<256x256xf32>
    %c0_15 = arith.constant 0 : index
    %c0_16 = arith.constant 0 : index
    %c0_17 = arith.constant 0 : index
    %38 = vector.load %arg6[%c0_15, %c0_16, %c0_17] : memref<3x1x256xf32, #tpu.memory_space<vmem>>, vector<1x1x256xf32>
    %39 = vector.shape_cast %38 : vector<1x1x256xf32> to vector<1x256xf32>
    %40 = vector.broadcast %39 : vector<1x256xf32> to vector<256x256xf32>
    %41 = arith.addf %37, %40 : vector<256x256xf32>
    %cst_18 = arith.constant 0.000000e+00 : f32
    %42 = vector.broadcast %cst_18 : f32 to vector<256x256xf32>
    %43 = arith.maximumf %41, %42 : vector<256x256xf32>
    %44 = arith.truncf %43 : vector<256x256xf32> to vector<256x256xbf16>
    %c1 = arith.constant 1 : index
    %c0_19 = arith.constant 0 : index
    %c0_20 = arith.constant 0 : index
    %45 = vector.load %arg5[%c1, %c0_19, %c0_20] : memref<3x256x256xbf16, #tpu.memory_space<vmem>>, vector<1x256x256xbf16>
    %46 = vector.shape_cast %45 : vector<1x256x256xbf16> to vector<256x256xbf16>
    %cst_21 = arith.constant dense<0.000000e+00> : vector<256x256xf32>
    %47 = tpu.matmul %44, %46, %cst_21 {dimension_numbers = #tpu.dot_dimension_numbers<[1], [0], [0], [1], [0, 0, 1, 1], [], []>} : vector<256x256xbf16>, vector<256x256xbf16>, vector<256x256xf32> -> vector<256x256xf32>
    %c1_22 = arith.constant 1 : index
    %c0_23 = arith.constant 0 : index
    %c0_24 = arith.constant 0 : index
    %48 = vector.load %arg6[%c1_22, %c0_23, %c0_24] : memref<3x1x256xf32, #tpu.memory_space<vmem>>, vector<1x1x256xf32>
    %49 = vector.shape_cast %48 : vector<1x1x256xf32> to vector<1x256xf32>
    %50 = vector.broadcast %49 : vector<1x256xf32> to vector<256x256xf32>
    %51 = arith.addf %47, %50 : vector<256x256xf32>
    %cst_25 = arith.constant 0.000000e+00 : f32
    %52 = vector.broadcast %cst_25 : f32 to vector<256x256xf32>
    %53 = arith.maximumf %51, %52 : vector<256x256xf32>
    %54 = arith.truncf %53 : vector<256x256xf32> to vector<256x256xbf16>
    %c2 = arith.constant 2 : index
    %c0_26 = arith.constant 0 : index
    %c0_27 = arith.constant 0 : index
    %55 = vector.load %arg5[%c2, %c0_26, %c0_27] : memref<3x256x256xbf16, #tpu.memory_space<vmem>>, vector<1x256x256xbf16>
    %56 = vector.shape_cast %55 : vector<1x256x256xbf16> to vector<256x256xbf16>
    %cst_28 = arith.constant dense<0.000000e+00> : vector<256x256xf32>
    %57 = tpu.matmul %54, %56, %cst_28 {dimension_numbers = #tpu.dot_dimension_numbers<[1], [0], [0], [1], [0, 0, 1, 1], [], []>} : vector<256x256xbf16>, vector<256x256xbf16>, vector<256x256xf32> -> vector<256x256xf32>
    %c2_29 = arith.constant 2 : index
    %c0_30 = arith.constant 0 : index
    %c0_31 = arith.constant 0 : index
    %58 = vector.load %arg6[%c2_29, %c0_30, %c0_31] : memref<3x1x256xf32, #tpu.memory_space<vmem>>, vector<1x1x256xf32>
    %59 = vector.shape_cast %58 : vector<1x1x256xf32> to vector<1x256xf32>
    %60 = vector.broadcast %59 : vector<1x256xf32> to vector<256x256xf32>
    %61 = arith.addf %57, %60 : vector<256x256xf32>
    %cst_32 = arith.constant 0.000000e+00 : f32
    %62 = vector.broadcast %cst_32 : f32 to vector<256x256xf32>
    %63 = arith.maximumf %61, %62 : vector<256x256xf32>
    %c0_33 = arith.constant 0 : index
    %c0_34 = arith.constant 0 : index
    %64 = vector.load %arg7[%c0_33, %c0_34] : memref<8x256xbf16, #tpu.memory_space<vmem>>, vector<8x256xbf16>
    %65 = arith.truncf %63 : vector<256x256xf32> to vector<256x256xbf16>
    %cst_35 = arith.constant dense<0.000000e+00> : vector<8x256xf32>
    %66 = tpu.matmul %64, %65, %cst_35 {dimension_numbers = #tpu.dot_dimension_numbers<[1], [1], [0], [0], [0, 0, 1, 0], [], []>} : vector<8x256xbf16>, vector<256x256xbf16>, vector<8x256xf32> -> vector<8x256xf32>
    %c0_36 = arith.constant 0 : index
    %c0_37 = arith.constant 0 : index
    %67 = vector.load %arg8[%c0_36, %c0_37] : memref<8x1xf32, #tpu.memory_space<vmem>>, vector<8x1xf32>
    %68 = vector.broadcast %67 : vector<8x1xf32> to vector<8x256xf32>
    %69 = arith.addf %66, %68 : vector<8x256xf32>
    %cst_38 = arith.constant -3.000000e+01 : f32
    %cst_39 = arith.constant 3.000000e+01 : f32
    %70 = vector.broadcast %cst_38 : f32 to vector<8x256xf32>
    %71 = arith.maximumf %70, %69 : vector<8x256xf32>
    %72 = vector.broadcast %cst_39 : f32 to vector<8x256xf32>
    %73 = arith.minimumf %72, %71 : vector<8x256xf32>
    %cst_40 = arith.constant 0.000000e+00 : f32
    %74 = vector.broadcast %cst_40 : f32 to vector<8x256xf32>
    %75 = arith.subf %74, %73 : vector<8x256xf32>
    %76 = math.exp %75 : vector<8x256xf32>
    %cst_41 = arith.constant 1.000000e+00 : f32
    %77 = vector.broadcast %cst_41 : f32 to vector<8x256xf32>
    %78 = arith.addf %77, %76 : vector<8x256xf32>
    %79 = tpu.reciprocal %78 {approx = true} : vector<8x256xf32> -> vector<8x256xf32>
    %c0_42 = arith.constant 0 : index
    %c0_43 = arith.constant 0 : index
    %80 = vector.load %arg9[%c0_42, %c0_43] : memref<8x256xf32, #tpu.memory_space<vmem>>, vector<8x256xf32>
    tpu.vector_store %arg9[%c0_42, %c0_43], %79 {strides = array<i32>} : memref<8x256xf32, #tpu.memory_space<vmem>>, vector<8x256xf32>,
    return
  }
  func.func @transform_0(%arg0: i32) -> (i32, i32) {
    %c0_i32 = arith.constant 0 : i32
    %c0_i32_0 = arith.constant 0 : i32
    return %arg0, %c0_i32 : i32, i32
  }
  func.func @transform_1(%arg0: i32) -> (i32, i32) {
    %c0_i32 = arith.constant 0 : i32
    %c0_i32_0 = arith.constant 0 : i32
    return %arg0, %c0_i32 : i32, i32
  }
  func.func @transform_2(%arg0: i32) -> (i32, i32) {
    %c0_i32 = arith.constant 0 : i32
    %c0_i32_0 = arith.constant 0 : i32
    %c0_i32_1 = arith.constant 0 : i32
    return %c0_i32, %c0_i32_0 : i32, i32
  }
  func.func @transform_3(%arg0: i32) -> (i32, i32) {
    %c0_i32 = arith.constant 0 : i32
    %c0_i32_0 = arith.constant 0 : i32
    %c0_i32_1 = arith.constant 0 : i32
    return %c0_i32, %c0_i32_0 : i32, i32
  }
  func.func @transform_4(%arg0: i32) -> (i32, i32, i32) {
    %c0_i32 = arith.constant 0 : i32
    %c0_i32_0 = arith.constant 0 : i32
    %c0_i32_1 = arith.constant 0 : i32
    %c0_i32_2 = arith.constant 0 : i32
    return %c0_i32, %c0_i32_0, %c0_i32_1 : i32, i32, i32
  }
  func.func @transform_5(%arg0: i32) -> (i32, i32, i32) {
    %c0_i32 = arith.constant 0 : i32
    %c0_i32_0 = arith.constant 0 : i32
    %c0_i32_1 = arith.constant 0 : i32
    %c0_i32_2 = arith.constant 0 : i32
    return %c0_i32, %c0_i32_0, %c0_i32_1 : i32, i32, i32
  }
  func.func @transform_6(%arg0: i32) -> (i32, i32) {
    %c0_i32 = arith.constant 0 : i32
    %c0_i32_0 = arith.constant 0 : i32
    %c0_i32_1 = arith.constant 0 : i32
    return %c0_i32, %c0_i32_0 : i32, i32
  }
  func.func @transform_7(%arg0: i32) -> (i32, i32) {
    %c0_i32 = arith.constant 0 : i32
    %c0_i32_0 = arith.constant 0 : i32
    %c0_i32_1 = arith.constant 0 : i32
    return %c0_i32, %c0_i32_0 : i32, i32
  }
  func.func @transform_8(%arg0: i32) -> (i32, i32) {
    %c0_i32 = arith.constant 0 : i32
    %c0_i32_0 = arith.constant 0 : i32
    return %c0_i32, %arg0 : i32, i32
  }
}

</mosaic_0001>

<llo_original>
// kernel: tpu_custom_call.1
$region0: #{tpu_custom_call.1}
  #allocation0 [shape = 'u32[]', space=smem, size = 0x4, offset = 0x4, fixed_abs, tag = 'smem constant byte address 0x4 - core index']
  #allocation1 [shape = 'u32[144,128]{1,0:T(1,128)}', space=vmem, size = 0x12000, scoped, tag = 'internal scratch']
  %s0 = inlined_call_operand.vmem [shape: f32[1024,2], index: 0, kind: input, shape index: {}]
  %s1 = inlined_call_operand.vmem [shape: s32[1024,1], index: 1, kind: input, shape index: {}]
  %s2 = inlined_call_operand.vmem [shape: f32[32,256], index: 2, kind: input, shape index: {}]
  %s3 = inlined_call_operand.vmem [shape: f32[1,256], index: 3, kind: input, shape index: {}]
  %s4 = inlined_call_operand.vmem [shape: bf16[3,256,256], index: 4, kind: input, shape index: {}]
  %s5 = inlined_call_operand.vmem [shape: f32[3,1,256], index: 5, kind: input, shape index: {}]
  %s6 = inlined_call_operand.vmem [shape: bf16[8,256], index: 6, kind: input, shape index: {}]
  %s7 = inlined_call_operand.vmem [shape: f32[8,1], index: 7, kind: input, shape index: {}]
  %s8 = inlined_call_operand.hbm [shape: f32[8,1024], index: 8, kind: output, shape index: {}]
  %s9 = sld [smem:[#allocation0]]
  $region65: #{tpu_custom_call.1} parent=0
    _
  %s11 = ssub.s32 1, %s9
  %s12 = scalar_select 0, %s11, %s9
  $region1: #{tpu_custom_call.1} parent=0
    #allocation2 [shape = 'u8[16384]{0}', space=vmem, size = 0x4000, scoped, tag = 'output window, operand 0']
    #allocation3 [shape = 's32[2]{0}', space=sflag, size = 0x8, scoped, tag = 'scoped memory for tpu_custom_call.1']
    %13 = vsyncpa [#allocation3], 0
    %s14 = scalar_lea.sflag [#allocation3], 1
    %15 = vsyncpa %s14, 0
    loop: start=0, step=1, limit=6
    $region2: #{tpu_custom_call.1} parent=1 // loop_pre_header
      _
    $region3: #{tpu_custom_call.1} parent=1 // loop_header
      %s17 = sphi 0, %s21
      %p18 = scmp.ge.s32.totalorder %s17, 6
      %s27 = sphi 0, %s29
      %s30 = sphi 0, %s27
      %s31 = sphi 0, %s30
      %s47 = sphi 0, %s31
      %s53 = sphi 0, %s55
      %s56 = sphi 0, %s53
      %s57 = sphi 0, %s56
      %s73 = sphi 0, %s57
      %s77 = sphi 0, %s77
      %s79 = sphi 0, %s77
      %s80 = sphi 0, %s79
      %s94 = sphi 0, %s80
      %s98 = sphi 0, %s98
      %s100 = sphi 0, %s98
      %s101 = sphi 0, %s100
      %s115 = sphi 0, %s101
      %s119 = sphi 0, %s119
      %s121 = sphi 0, %s119
      %s122 = sphi 0, %s121
      %s136 = sphi 0, %s122
      %s140 = sphi 0, %s140
      %s142 = sphi 0, %s140
      %s143 = sphi 0, %s142
      %s157 = sphi 0, %s143
      %s161 = sphi 0, %s161
      %s163 = sphi 0, %s161
      %s164 = sphi 0, %s163
      %s178 = sphi 0, %s164
      %s182 = sphi 0, %s182
      %s184 = sphi 0, %s182
      %s185 = sphi 0, %s184
      %s199 = sphi 0, %s185
      %s205 = sphi 0, %s207
      %s208 = sphi 0, %s205
      %s209 = sphi 0, %s208
      %s225 = sphi 0, %s209
    $region4: #{tpu_custom_call.1} parent=1 // loop_header_branch
      %20 = sbr.rel (%p18) target = $region8
    $region5: #{tpu_custom_call.1} parent=1 // loop_body
      %s22 = ssub.s32 %s17, 1
      %s23 = ssub.s32 %s17, 2
      %s24 = sadd.s32 %s17, 1
      %s25 = ssub.s32 %s17, %s24
      %p26 = scmp.eq.s32.totalorder %s25, 0
      %s28 = sadd.s32 %s27, 1
      %s29 = scalar_select %p26, %s27, %s28
      %p32 = pneg %p26
      %p33 = scmp.eq.s32.totalorder %s17, 3
      %p34 = por %p32, %p33
      %p35 = scmp.ne.s32.totalorder %s27, %s30
      %p36 = scmp.eq.s32.totalorder %s17, 0
      %p37 = por %p35, %p36
      %p38 = scmp.ne.s32.totalorder %s27, %s30
      %p39 = scmp.eq.s32.totalorder %s22, 3
      %p40 = por %p38, %p39
      %p41 = scmp.ne.s32.totalorder %s30, %s31
      %p42 = scmp.eq.s32.totalorder %s22, 0
      %p43 = por %p41, %p42
      %p44 = scmp.ne.s32.totalorder %s30, %s31
      %p45 = scmp.eq.s32.totalorder %s23, 3
      %p46 = por %p44, %p45
      %p48 = scmp.ne.s32.totalorder %s31, %s47
      %p49 = scmp.eq.s32.totalorder %s23, 0
      %p50 = por %p48, %p49
      %s51 = ssub.s32 %s17, %s24
      %p52 = scmp.eq.s32.totalorder %s51, 0
      %s54 = sadd.s32 %s53, 1
      %s55 = scalar_select %p52, %s53, %s54
      %p58 = pneg %p52
      %p59 = scmp.eq.s32.totalorder %s17, 3
      %p60 = por %p58, %p59
      %p61 = scmp.ne.s32.totalorder %s53, %s56
      %p62 = scmp.eq.s32.totalorder %s17, 0
      %p63 = por %p61, %p62
      %p64 = scmp.ne.s32.totalorder %s53, %s56
      %p65 = scmp.eq.s32.totalorder %s22, 3
      %p66 = por %p64, %p65
      %p67 = scmp.ne.s32.totalorder %s56, %s57
      %p68 = scmp.eq.s32.totalorder %s22, 0
      %p69 = por %p67, %p68
      %p70 = scmp.ne.s32.totalorder %s56, %s57
      %p71 = scmp.eq.s32.totalorder %s23, 3
      %p72 = por %p70, %p71
      %p74 = scmp.ne.s32.totalorder %s57, %s73
      %p75 = scmp.eq.s32.totalorder %s23, 0
      %p76 = por %p74, %p75
      %s78 = sadd.s32 %s77, 1
      %p81 = scmp.eq.s32.totalorder %s17, 3
      %p82 = scmp.ne.s32.totalorder %s77, %s79
      %p83 = scmp.eq.s32.totalorder %s17, 0
      %p84 = por %p82, %p83
      %p85 = scmp.ne.s32.totalorder %s77, %s79
      %p86 = scmp.eq.s32.totalorder %s22, 3
      %p87 = por %p85, %p86
      %p88 = scmp.ne.s32.totalorder %s79, %s80
      %p89 = scmp.eq.s32.totalorder %s22, 0
      %p90 = por %p88, %p89
      %p91 = scmp.ne.s32.totalorder %s79, %s80
      %p92 = scmp.eq.s32.totalorder %s23, 3
      %p93 = por %p91, %p92
      %p95 = scmp.ne.s32.totalorder %s80, %s94
      %p96 = scmp.eq.s32.totalorder %s23, 0
      %p97 = por %p95, %p96
      %s99 = sadd.s32 %s98, 1
      %p102 = scmp.eq.s32.totalorder %s17, 3
      %p103 = scmp.ne.s32.totalorder %s98, %s100
      %p104 = scmp.eq.s32.totalorder %s17, 0
      %p105 = por %p103, %p104
      %p106 = scmp.ne.s32.totalorder %s98, %s100
      %p107 = scmp.eq.s32.totalorder %s22, 3
      %p108 = por %p106, %p107
      %p109 = scmp.ne.s32.totalorder %s100, %s101
      %p110 = scmp.eq.s32.totalorder %s22, 0
      %p111 = por %p109, %p110
      %p112 = scmp.ne.s32.totalorder %s100, %s101
      %p113 = scmp.eq.s32.totalorder %s23, 3
      %p114 = por %p112, %p113
      %p116 = scmp.ne.s32.totalorder %s101, %s115
      %p117 = scmp.eq.s32.totalorder %s23, 0
      %p118 = por %p116, %p117
      %s120 = sadd.s32 %s119, 1
      %p123 = scmp.eq.s32.totalorder %s17, 3
      %p124 = scmp.ne.s32.totalorder %s119, %s121
      %p125 = scmp.eq.s32.totalorder %s17, 0
      %p126 = por %p124, %p125
      %p127 = scmp.ne.s32.totalorder %s119, %s121
      %p128 = scmp.eq.s32.totalorder %s22, 3
      %p129 = por %p127, %p128
      %p130 = scmp.ne.s32.totalorder %s121, %s122
      %p131 = scmp.eq.s32.totalorder %s22, 0
      %p132 = por %p130, %p131
      %p133 = scmp.ne.s32.totalorder %s121, %s122
      %p134 = scmp.eq.s32.totalorder %s23, 3
      %p135 = por %p133, %p134
      %p137 = scmp.ne.s32.totalorder %s122, %s136
      %p138 = scmp.eq.s32.totalorder %s23, 0
      %p139 = por %p137, %p138
      %s141 = sadd.s32 %s140, 1
      %p144 = scmp.eq.s32.totalorder %s17, 3
      %p145 = scmp.ne.s32.totalorder %s140, %s142
      %p146 = scmp.eq.s32.totalorder %s17, 0
      %p147 = por %p145, %p146
      %p148 = scmp.ne.s32.totalorder %s140, %s142
      %p149 = scmp.eq.s32.totalorder %s22, 3
      %p150 = por %p148, %p149
      %p151 = scmp.ne.s32.totalorder %s142, %s143
      %p152 = scmp.eq.s32.totalorder %s22, 0
      %p153 = por %p151, %p152
      %p154 = scmp.ne.s32.totalorder %s142, %s143
      %p155 = scmp.eq.s32.totalorder %s23, 3
      %p156 = por %p154, %p155
      %p158 = scmp.ne.s32.totalorder %s143, %s157
      %p159 = scmp.eq.s32.totalorder %s23, 0
      %p160 = por %p158, %p159
      %s162 = sadd.s32 %s161, 1
      %p165 = scmp.eq.s32.totalorder %s17, 3
      %p166 = scmp.ne.s32.totalorder %s161, %s163
      %p167 = scmp.eq.s32.totalorder %s17, 0
      %p168 = por %p166, %p167
      %p169 = scmp.ne.s32.totalorder %s161, %s163
      %p170 = scmp.eq.s32.totalorder %s22, 3
      %p171 = por %p169, %p170
      %p172 = scmp.ne.s32.totalorder %s163, %s164
      %p173 = scmp.eq.s32.totalorder %s22, 0
      %p174 = por %p172, %p173
      %p175 = scmp.ne.s32.totalorder %s163, %s164
      %p176 = scmp.eq.s32.totalorder %s23, 3
      %p177 = por %p175, %p176
      %p179 = scmp.ne.s32.totalorder %s164, %s178
      %p180 = scmp.eq.s32.totalorder %s23, 0
      %p181 = por %p179, %p180
      %s183 = sadd.s32 %s182, 1
      %p186 = scmp.eq.s32.totalorder %s17, 3
      %p187 = scmp.ne.s32.totalorder %s182, %s184
      %p188 = scmp.eq.s32.totalorder %s17, 0
      %p189 = por %p187, %p188
      %p190 = scmp.ne.s32.totalorder %s182, %s184
      %p191 = scmp.eq.s32.totalorder %s22, 3
      %p192 = por %p190, %p191
      %p193 = scmp.ne.s32.totalorder %s184, %s185
      %p194 = scmp.eq.s32.totalorder %s22, 0
      %p195 = por %p193, %p194
      %p196 = scmp.ne.s32.totalorder %s184, %s185
      %p197 = scmp.eq.s32.totalorder %s23, 3
      %p198 = por %p196, %p197
      %p200 = scmp.ne.s32.totalorder %s185, %s199
      %p201 = scmp.eq.s32.totalorder %s23, 0
      %p202 = por %p200, %p201
      %s203 = ssub.s32 %s17, %s24
      %p204 = scmp.eq.s32.totalorder %s203, 0
      %s206 = sadd.s32 %s205, 1
      %s207 = scalar_select %p204, %s205, %s206
      %p210 = pneg %p204
      %p211 = scmp.eq.s32.totalorder %s17, 3
      %p212 = por %p210, %p211
      %p213 = scmp.ne.s32.totalorder %s205, %s208
      %p214 = scmp.eq.s32.totalorder %s17, 0
      %p215 = por %p213, %p214
      %p216 = scmp.ne.s32.totalorder %s205, %s208
      %p217 = scmp.eq.s32.totalorder %s22, 3
      %p218 = por %p216, %p217
      %p219 = scmp.ne.s32.totalorder %s208, %s209
      %p220 = scmp.eq.s32.totalorder %s22, 0
      %p221 = por %p219, %p220
      %p222 = scmp.ne.s32.totalorder %s208, %s209
      %p223 = scmp.eq.s32.totalorder %s23, 3
      %p224 = por %p222, %p223
      %p226 = scmp.ne.s32.totalorder %s209, %s225
      %p227 = scmp.eq.s32.totalorder %s23, 0
      %p228 = por %p226, %p227
      %p229 = scmp.le.s32.totalorder 1, %s17
      %p230 = scmp.lt.s32.totalorder %s17, 5
      %p231 = pnand %p229, %p230
      %p232 = pneg %p231
      // Predicated region
      $region9: #{tpu_custom_call.1} parent=5 // pred_check
        _
      $region10: #{tpu_custom_call.1} parent=5 // pred_check_branch
        %234 = sbr.rel (%p231) target = $region12
      $region11: #{tpu_custom_call.1} parent=5 // pred_region
        %s235 = ssub.s32 %s17, 1
        // Predicated region
        $region13: #{tpu_custom_call.1} parent=11 // pred_check
          %p236 = pneg %p90
        $region14: #{tpu_custom_call.1} parent=11 // pred_check_branch
          %238 = sbr.rel (%p236) target = $region16
        $region15: #{tpu_custom_call.1} parent=11 // pred_region
          _
        $region16: #{tpu_custom_call.1} parent=11 // pred_fallthru
          _
        // Predicated region
        $region17: #{tpu_custom_call.1} parent=11 // pred_check
          %p239 = pneg %p111
        $region18: #{tpu_custom_call.1} parent=11 // pred_check_branch
          %241 = sbr.rel (%p239) target = $region20
        $region19: #{tpu_custom_call.1} parent=11 // pred_region
          _
        $region20: #{tpu_custom_call.1} parent=11 // pred_fallthru
          _
        // Predicated region
        $region21: #{tpu_custom_call.1} parent=11 // pred_check
          %p242 = pneg %p132
        $region22: #{tpu_custom_call.1} parent=11 // pred_check_branch
          %244 = sbr.rel (%p242) target = $region24
        $region23: #{tpu_custom_call.1} parent=11 // pred_region
          _
        $region24: #{tpu_custom_call.1} parent=11 // pred_fallthru
          _
        // Predicated region
        $region25: #{tpu_custom_call.1} parent=11 // pred_check
          %p245 = pneg %p153
        $region26: #{tpu_custom_call.1} parent=11 // pred_check_branch
          %247 = sbr.rel (%p245) target = $region28
        $region27: #{tpu_custom_call.1} parent=11 // pred_region
          _
        $region28: #{tpu_custom_call.1} parent=11 // pred_fallthru
          _
        // Predicated region
        $region29: #{tpu_custom_call.1} parent=11 // pred_check
          %p248 = pneg %p174
        $region30: #{tpu_custom_call.1} parent=11 // pred_check_branch
          %250 = sbr.rel (%p248) target = $region32
        $region31: #{tpu_custom_call.1} parent=11 // pred_region
          _
        $region32: #{tpu_custom_call.1} parent=11 // pred_fallthru
          _
        // Predicated region
        $region33: #{tpu_custom_call.1} parent=11 // pred_check
          %p251 = pneg %p195
        $region34: #{tpu_custom_call.1} parent=11 // pred_check_branch
          %253 = sbr.rel (%p251) target = $region36
        $region35: #{tpu_custom_call.1} parent=11 // pred_region
          _
        $region36: #{tpu_custom_call.1} parent=11 // pred_fallthru
          _
      $region12: #{tpu_custom_call.1} parent=5 // pred_fallthru
        _
      %p254 = scmp.lt.s32.totalorder %s17, 4
      // Predicated region
      $region37: #{tpu_custom_call.1} parent=5 // pred_check
        %p255 = pneg %p254
      $region38: #{tpu_custom_call.1} parent=5 // pred_check_branch
        %257 = sbr.rel (%p255) target = $region40
      $region39: #{tpu_custom_call.1} parent=5 // pred_region
        // Predicated region
        $region41: #{tpu_custom_call.1} parent=39 // pred_check
          %p258 = pneg %p37
        $region42: #{tpu_custom_call.1} parent=39 // pred_check_branch
          %260 = sbr.rel (%p258) target = $region44
        $region43: #{tpu_custom_call.1} parent=39 // pred_region
          %s261 = smul.u32 32, %s17
          %p262 = scmp.lt.s32.totalorder %s261, 127
          %s263 = scalar_select %p262, %s261, 127
          %s264 = smul.addr %s263, 8
          %s265 = scalar_lea.vmem %s0, %s264
          %s266 = smul.u32 32, %s17
        $region44: #{tpu_custom_call.1} parent=39 // pred_fallthru
          _
        // Predicated region
        $region45: #{tpu_custom_call.1} parent=39 // pred_check
          %p267 = pneg %p63
        $region46: #{tpu_custom_call.1} parent=39 // pred_check_branch
          %269 = sbr.rel (%p267) target = $region48
        $region47: #{tpu_custom_call.1} parent=39 // pred_region
          %s270 = smul.u32 32, %s17
          %p271 = scmp.lt.s32.totalorder %s270, 127
          %s272 = scalar_select %p271, %s270, 127
          %s273 = smul.addr %s272, 8
          %s274 = scalar_lea.vmem %s1, %s273
          %s275 = smul.u32 32, %s17
        $region48: #{tpu_custom_call.1} parent=39 // pred_fallthru
          _
      $region40: #{tpu_custom_call.1} parent=5 // pred_fallthru
        _
      %p276 = scmp.le.s32.totalorder 1, %s17
      %p277 = scmp.lt.s32.totalorder %s17, 5
      %p278 = pnand %p276, %p277
      %p279 = pneg %p278
      // Predicated region
      $region49: #{tpu_custom_call.1} parent=5 // pred_check
        _
      $region50: #{tpu_custom_call.1} parent=5 // pred_check_branch
        %281 = sbr.rel (%p278) target = $region52
      $region51: #{tpu_custom_call.1} parent=5 // pred_region
        %s282 = ssub.s32 %s17, 1
        %s283 = smul.u32 32, %s22
        %p284 = scmp.lt.s32.totalorder %s283, 127
        %s285 = scalar_select %p284, %s283, 127
        %s286 = smul.addr %s285, 8
        %s287 = scalar_lea.vmem %s0, %s286
        %p288 = pneg %p43
        %p289 = pneg %p40
        %s290 = smul.u32 32, %s22
        %p291 = scmp.lt.s32.totalorder %s290, 127
        %s292 = scalar_select %p291, %s290, 127
        %s293 = smul.addr %s292, 8
        %s294 = scalar_lea.vmem %s1, %s293
        %p295 = pneg %p69
        %p296 = pneg %p66
        %p297 = pneg %p90
        %p298 = pneg %p87
        %p299 = pneg %p111
        %p300 = pneg %p108
        %p301 = pneg %p132
        %p302 = pneg %p129
        %p303 = pneg %p153
        %p304 = pneg %p150
        %p305 = pneg %p174
        %p306 = pneg %p171
        %p307 = pneg %p195
        %p308 = pneg %p192
        %p309 = pneg %p221
        %p310 = pneg %p218
        %s311 = sand.u32 %s208, 1
        %s312 = scalar_lea.sflag [#allocation3], %s311
        %s313 = sand.u32 %s208, 1
        %s314 = smul.addr %s313, 16
        %s315 = scalar_lea.vmem [#allocation2], %s314
        %s316 = smul.u32 32, %s22
        %p317 = scmp.lt.s32.totalorder %s316, 127
        %s318 = scalar_select %p317, %s316, 127
        %s319 = smul.addr %s318, 8
        %s320 = scalar_lea.vmem %s0, %s319
        %s321 = smul.u32 32, %s22
        %s322 = smul.u32 32, %s22
        %p323 = scmp.lt.s32.totalorder %s322, 127
        %s324 = scalar_select %p323, %s322, 127
        %s325 = smul.addr %s324, 8
        %s326 = scalar_lea.vmem %s1, %s325
        %s327 = smul.u32 32, %s22
        %s328 = smul.u32 2, %s22
        %v329 = vld [vmem:[%s320] sm:$0xff]
        %v330 = vld [vmem:[%s320 + $0x8] sm:$0xff]
        %v331 = vld [vmem:[%s320 + $0x10] sm:$0xff]
        %v332 = vld [vmem:[%s320 + $0x18] sm:$0xff]
        %v333 = vld [vmem:[%s320 + $0x20] sm:$0xff]
        %v334 = vld [vmem:[%s320 + $0x28] sm:$0xff]
        %v335 = vld [vmem:[%s320 + $0x30] sm:$0xff]
        %v336 = vld [vmem:[%s320 + $0x38] sm:$0xff]
        %v337 = vld [vmem:[%s320 + $0x40] sm:$0xff]
        %v338 = vld [vmem:[%s320 + $0x48] sm:$0xff]
        %v339 = vld [vmem:[%s320 + $0x50] sm:$0xff]
        %v340 = vld [vmem:[%s320 + $0x58] sm:$0xff]
        %v341 = vld [vmem:[%s320 + $0x60] sm:$0xff]
        %v342 = vld [vmem:[%s320 + $0x68] sm:$0xff]
        %v343 = vld [vmem:[%s320 + $0x70] sm:$0xff]
        %v344 = vld [vmem:[%s320 + $0x78] sm:$0xff]
        %v345 = vld [vmem:[%s320 + $0x80] sm:$0xff]
        %v346 = vld [vmem:[%s320 + $0x88] sm:$0xff]
        %v347 = vld [vmem:[%s320 + $0x90] sm:$0xff]
        %v348 = vld [vmem:[%s320 + $0x98] sm:$0xff]
        %v349 = vld [vmem:[%s320 + $0xa0] sm:$0xff]
        %v350 = vld [vmem:[%s320 + $0xa8] sm:$0xff]
        %v351 = vld [vmem:[%s320 + $0xb0] sm:$0xff]
        %v352 = vld [vmem:[%s320 + $0xb8] sm:$0xff]
        %v353 = vld [vmem:[%s320 + $0xc0] sm:$0xff]
        %v354 = vld [vmem:[%s320 + $0xc8] sm:$0xff]
        %v355 = vld [vmem:[%s320 + $0xd0] sm:$0xff]
        %v356 = vld [vmem:[%s320 + $0xd8] sm:$0xff]
        %v357 = vld [vmem:[%s320 + $0xe0] sm:$0xff]
        %v358 = vld [vmem:[%s320 + $0xe8] sm:$0xff]
        %v359 = vld [vmem:[%s320 + $0xf0] sm:$0xff]
        %v360 = vld [vmem:[%s320 + $0xf8] sm:$0xff]
        %v361 = vld [vmem:[%s326] sm:$0xff]
        %v362 = vld [vmem:[%s326 + $0x8] sm:$0xff]
        %v363 = vld [vmem:[%s326 + $0x10] sm:$0xff]
        %v364 = vld [vmem:[%s326 + $0x18] sm:$0xff]
        %v365 = vld [vmem:[%s326 + $0x20] sm:$0xff]
        %v366 = vld [vmem:[%s326 + $0x28] sm:$0xff]
        %v367 = vld [vmem:[%s326 + $0x30] sm:$0xff]
        %v368 = vld [vmem:[%s326 + $0x38] sm:$0xff]
        %v369 = vld [vmem:[%s326 + $0x40] sm:$0xff]
        %v370 = vld [vmem:[%s326 + $0x48] sm:$0xff]
        %v371 = vld [vmem:[%s326 + $0x50] sm:$0xff]
        %v372 = vld [vmem:[%s326 + $0x58] sm:$0xff]
        %v373 = vld [vmem:[%s326 + $0x60] sm:$0xff]
        %v374 = vld [vmem:[%s326 + $0x68] sm:$0xff]
        %v375 = vld [vmem:[%s326 + $0x70] sm:$0xff]
        %v376 = vld [vmem:[%s326 + $0x78] sm:$0xff]
        %v377 = vld [vmem:[%s326 + $0x80] sm:$0xff]
        %v378 = vld [vmem:[%s326 + $0x88] sm:$0xff]
        %v379 = vld [vmem:[%s326 + $0x90] sm:$0xff]
        %v380 = vld [vmem:[%s326 + $0x98] sm:$0xff]
        %v381 = vld [vmem:[%s326 + $0xa0] sm:$0xff]
        %v382 = vld [vmem:[%s326 + $0xa8] sm:$0xff]
        %v383 = vld [vmem:[%s326 + $0xb0] sm:$0xff]
        %v384 = vld [vmem:[%s326 + $0xb8] sm:$0xff]
        %v385 = vld [vmem:[%s326 + $0xc0] sm:$0xff]
        %v386 = vld [vmem:[%s326 + $0xc8] sm:$0xff]
        %v387 = vld [vmem:[%s326 + $0xd0] sm:$0xff]
        %v388 = vld [vmem:[%s326 + $0xd8] sm:$0xff]
        %v389 = vld [vmem:[%s326 + $0xe0] sm:$0xff]
        %v390 = vld [vmem:[%s326 + $0xe8] sm:$0xff]
        %v391 = vld [vmem:[%s326 + $0xf0] sm:$0xff]
        %v392 = vld [vmem:[%s326 + $0xf8] sm:$0xff]
        %v393 = vlaneseq
        %v394 = vand.u32 %v393, 127
        %vm395 = vcmp.eq.s32.totalorder %v394, 0
        %397 = vset.pattern.permute.xlu0 0
        %398 = vperm.xlu0 %397, %v329
        %v399 = vpop.permute.xlu0 %398
        %402 = vset.pattern.permute.xlu0 0
        %403 = vperm.xlu0 %402, %v330
        %v404 = vpop.permute.xlu0 %403
        %407 = vset.pattern.permute.xlu0 0
        %408 = vperm.xlu0 %407, %v331
        %v409 = vpop.permute.xlu0 %408
        %412 = vset.pattern.permute.xlu0 0
        %413 = vperm.xlu0 %412, %v332
        %v414 = vpop.permute.xlu0 %413
        %417 = vset.pattern.permute.xlu0 0
        %418 = vperm.xlu0 %417, %v333
        %v419 = vpop.permute.xlu0 %418
        %422 = vset.pattern.permute.xlu0 0
        %423 = vperm.xlu0 %422, %v334
        %v424 = vpop.permute.xlu0 %423
        %427 = vset.pattern.permute.xlu0 0
        %428 = vperm.xlu0 %427, %v335
        %v429 = vpop.permute.xlu0 %428
        %432 = vset.pattern.permute.xlu0 0
        %433 = vperm.xlu0 %432, %v336
        %v434 = vpop.permute.xlu0 %433
        %437 = vset.pattern.permute.xlu0 0
        %438 = vperm.xlu0 %437, %v337
        %v439 = vpop.permute.xlu0 %438
        %442 = vset.pattern.permute.xlu0 0
        %443 = vperm.xlu0 %442, %v338
        %v444 = vpop.permute.xlu0 %443
        %447 = vset.pattern.permute.xlu0 0
        %448 = vperm.xlu0 %447, %v339
        %v449 = vpop.permute.xlu0 %448
        %452 = vset.pattern.permute.xlu0 0
        %453 = vperm.xlu0 %452, %v340
        %v454 = vpop.permute.xlu0 %453
        %457 = vset.pattern.permute.xlu0 0
        %458 = vperm.xlu0 %457, %v341
        %v459 = vpop.permute.xlu0 %458
        %462 = vset.pattern.permute.xlu0 0
        %463 = vperm.xlu0 %462, %v342
        %v464 = vpop.permute.xlu0 %463
        %467 = vset.pattern.permute.xlu0 0
        %468 = vperm.xlu0 %467, %v343
        %v469 = vpop.permute.xlu0 %468
        %472 = vset.pattern.permute.xlu0 0
        %473 = vperm.xlu0 %472, %v344
        %v474 = vpop.permute.xlu0 %473
        %477 = vset.pattern.permute.xlu0 0
        %478 = vperm.xlu0 %477, %v345
        %v479 = vpop.permute.xlu0 %478
        %482 = vset.pattern.permute.xlu0 0
        %483 = vperm.xlu0 %482, %v346
        %v484 = vpop.permute.xlu0 %483
        %487 = vset.pattern.permute.xlu0 0
        %488 = vperm.xlu0 %487, %v347
        %v489 = vpop.permute.xlu0 %488
        %492 = vset.pattern.permute.xlu0 0
        %493 = vperm.xlu0 %492, %v348
        %v494 = vpop.permute.xlu0 %493
        %497 = vset.pattern.permute.xlu0 0
        %498 = vperm.xlu0 %497, %v349
        %v499 = vpop.permute.xlu0 %498
        %502 = vset.pattern.permute.xlu0 0
        %503 = vperm.xlu0 %502, %v350
        %v504 = vpop.permute.xlu0 %503
        %507 = vset.pattern.permute.xlu0 0
        %508 = vperm.xlu0 %507, %v351
        %v509 = vpop.permute.xlu0 %508
        %512 = vset.pattern.permute.xlu0 0
        %513 = vperm.xlu0 %512, %v352
        %v514 = vpop.permute.xlu0 %513
        %517 = vset.pattern.permute.xlu0 0
        %518 = vperm.xlu0 %517, %v353
        %v519 = vpop.permute.xlu0 %518
        %522 = vset.pattern.permute.xlu0 0
        %523 = vperm.xlu0 %522, %v354
        %v524 = vpop.permute.xlu0 %523
        %527 = vset.pattern.permute.xlu0 0
        %528 = vperm.xlu0 %527, %v355
        %v529 = vpop.permute.xlu0 %528
        %532 = vset.pattern.permute.xlu0 0
        %533 = vperm.xlu0 %532, %v356
        %v534 = vpop.permute.xlu0 %533
        %537 = vset.pattern.permute.xlu0 0
        %538 = vperm.xlu0 %537, %v357
        %v539 = vpop.permute.xlu0 %538
        %542 = vset.pattern.permute.xlu0 0
        %543 = vperm.xlu0 %542, %v358
        %v544 = vpop.permute.xlu0 %543
        %547 = vset.pattern.permute.xlu0 0
        %548 = vperm.xlu0 %547, %v359
        %v549 = vpop.permute.xlu0 %548
        %552 = vset.pattern.permute.xlu0 0
        %553 = vperm.xlu0 %552, %v360
        %v554 = vpop.permute.xlu0 %553
        %v556 = vsel %vm395, %v399, 0.0
        %v557 = vsel %vm395, %v404, 0.0
        %v558 = vsel %vm395, %v409, 0.0
        %v559 = vsel %vm395, %v414, 0.0
        %v560 = vsel %vm395, %v419, 0.0
        %v561 = vsel %vm395, %v424, 0.0
        %v562 = vsel %vm395, %v429, 0.0
        %v563 = vsel %vm395, %v434, 0.0
        %v564 = vsel %vm395, %v439, 0.0
        %v565 = vsel %vm395, %v444, 0.0
        %v566 = vsel %vm395, %v449, 0.0
        %v567 = vsel %vm395, %v454, 0.0
        %v568 = vsel %vm395, %v459, 0.0
        %v569 = vsel %vm395, %v464, 0.0
        %v570 = vsel %vm395, %v469, 0.0
        %v571 = vsel %vm395, %v474, 0.0
        %v572 = vsel %vm395, %v479, 0.0
        %v573 = vsel %vm395, %v484, 0.0
        %v574 = vsel %vm395, %v489, 0.0
        %v575 = vsel %vm395, %v494, 0.0
        %v576 = vsel %vm395, %v499, 0.0
        %v577 = vsel %vm395, %v504, 0.0
        %v578 = vsel %vm395, %v509, 0.0
        %v579 = vsel %vm395, %v514, 0.0
        %v580 = vsel %vm395, %v519, 0.0
        %v581 = vsel %vm395, %v524, 0.0
        %v582 = vsel %vm395, %v529, 0.0
        %v583 = vsel %vm395, %v534, 0.0
        %v584 = vsel %vm395, %v539, 0.0
        %v585 = vsel %vm395, %v544, 0.0
        %v586 = vsel %vm395, %v549, 0.0
        %v587 = vsel %vm395, %v554, 0.0
        %v588 = vadd.f32 %v556, 0.0
        %v589 = vadd.f32 %v557, 0.0
        %v590 = vadd.f32 %v558, 0.0
        %v591 = vadd.f32 %v559, 0.0
        %v592 = vadd.f32 %v560, 0.0
        %v593 = vadd.f32 %v561, 0.0
        %v594 = vadd.f32 %v562, 0.0
        %v595 = vadd.f32 %v563, 0.0
        %v596 = vadd.f32 %v564, 0.0
        %v597 = vadd.f32 %v565, 0.0
        %v598 = vadd.f32 %v566, 0.0
        %v599 = vadd.f32 %v567, 0.0
        %v600 = vadd.f32 %v568, 0.0
        %v601 = vadd.f32 %v569, 0.0
        %v602 = vadd.f32 %v570, 0.0
        %v603 = vadd.f32 %v571, 0.0
        %v604 = vadd.f32 %v572, 0.0
        %v605 = vadd.f32 %v573, 0.0
        %v606 = vadd.f32 %v574, 0.0
        %v607 = vadd.f32 %v575, 0.0
        %v608 = vadd.f32 %v576, 0.0
        %v609 = vadd.f32 %v577, 0.0
        %v610 = vadd.f32 %v578, 0.0
        %v611 = vadd.f32 %v579, 0.0
        %v612 = vadd.f32 %v580, 0.0
        %v613 = vadd.f32 %v581, 0.0
        %v614 = vadd.f32 %v582, 0.0
        %v615 = vadd.f32 %v583, 0.0
        %v616 = vadd.f32 %v584, 0.0
        %v617 = vadd.f32 %v585, 0.0
        %v618 = vadd.f32 %v586, 0.0
        %v619 = vadd.f32 %v587, 0.0
        %vm620 = vcmp.eq.s32.totalorder %v394, 1
        %621 = vset.pattern.permute.xlu0 1
        %622 = vperm.xlu0 %621, %v329
        %v623 = vpop.permute.xlu0 %622
        %625 = vset.pattern.permute.xlu0 1
        %626 = vperm.xlu0 %625, %v330
        %v627 = vpop.permute.xlu0 %626
        %629 = vset.pattern.permute.xlu0 1
        %630 = vperm.xlu0 %629, %v331
        %v631 = vpop.permute.xlu0 %630
        %633 = vset.pattern.permute.xlu0 1
        %634 = vperm.xlu0 %633, %v332
        %v635 = vpop.permute.xlu0 %634
        %637 = vset.pattern.permute.xlu0 1
        %638 = vperm.xlu0 %637, %v333
        %v639 = vpop.permute.xlu0 %638
        %641 = vset.pattern.permute.xlu0 1
        %642 = vperm.xlu0 %641, %v334
        %v643 = vpop.permute.xlu0 %642
        %645 = vset.pattern.permute.xlu0 1
        %646 = vperm.xlu0 %645, %v335
        %v647 = vpop.permute.xlu0 %646
        %649 = vset.pattern.permute.xlu0 1
        %650 = vperm.xlu0 %649, %v336
        %v651 = vpop.permute.xlu0 %650
        %653 = vset.pattern.permute.xlu0 1
        %654 = vperm.xlu0 %653, %v337
        %v655 = vpop.permute.xlu0 %654
        %657 = vset.pattern.permute.xlu0 1
        %658 = vperm.xlu0 %657, %v338
        %v659 = vpop.permute.xlu0 %658
        %661 = vset.pattern.permute.xlu0 1
        %662 = vperm.xlu0 %661, %v339
        %v663 = vpop.permute.xlu0 %662
        %665 = vset.pattern.permute.xlu0 1
        %666 = vperm.xlu0 %665, %v340
        %v667 = vpop.permute.xlu0 %666
        %669 = vset.pattern.permute.xlu0 1
        %670 = vperm.xlu0 %669, %v341
        %v671 = vpop.permute.xlu0 %670
        %673 = vset.pattern.permute.xlu0 1
        %674 = vperm.xlu0 %673, %v342
        %v675 = vpop.permute.xlu0 %674
        %677 = vset.pattern.permute.xlu0 1
        %678 = vperm.xlu0 %677, %v343
        %v679 = vpop.permute.xlu0 %678
        %681 = vset.pattern.permute.xlu0 1
        %682 = vperm.xlu0 %681, %v344
        %v683 = vpop.permute.xlu0 %682
        %685 = vset.pattern.permute.xlu0 1
        %686 = vperm.xlu0 %685, %v345
        %v687 = vpop.permute.xlu0 %686
        %689 = vset.pattern.permute.xlu0 1
        %690 = vperm.xlu0 %689, %v346
        %v691 = vpop.permute.xlu0 %690
        %693 = vset.pattern.permute.xlu0 1
        %694 = vperm.xlu0 %693, %v347
        %v695 = vpop.permute.xlu0 %694
        %697 = vset.pattern.permute.xlu0 1
        %698 = vperm.xlu0 %697, %v348
        %v699 = vpop.permute.xlu0 %698
        %701 = vset.pattern.permute.xlu0 1
        %702 = vperm.xlu0 %701, %v349
        %v703 = vpop.permute.xlu0 %702
        %705 = vset.pattern.permute.xlu0 1
        %706 = vperm.xlu0 %705, %v350
        %v707 = vpop.permute.xlu0 %706
        %709 = vset.pattern.permute.xlu0 1
        %710 = vperm.xlu0 %709, %v351
        %v711 = vpop.permute.xlu0 %710
        %713 = vset.pattern.permute.xlu0 1
        %714 = vperm.xlu0 %713, %v352
        %v715 = vpop.permute.xlu0 %714
        %717 = vset.pattern.permute.xlu0 1
        %718 = vperm.xlu0 %717, %v353
        %v719 = vpop.permute.xlu0 %718
        %721 = vset.pattern.permute.xlu0 1
        %722 = vperm.xlu0 %721, %v354
        %v723 = vpop.permute.xlu0 %722
        %725 = vset.pattern.permute.xlu0 1
        %726 = vperm.xlu0 %725, %v355
        %v727 = vpop.permute.xlu0 %726
        %729 = vset.pattern.permute.xlu0 1
        %730 = vperm.xlu0 %729, %v356
        %v731 = vpop.permute.xlu0 %730
        %733 = vset.pattern.permute.xlu0 1
        %734 = vperm.xlu0 %733, %v357
        %v735 = vpop.permute.xlu0 %734
        %737 = vset.pattern.permute.xlu0 1
        %738 = vperm.xlu0 %737, %v358
        %v739 = vpop.permute.xlu0 %738
        %741 = vset.pattern.permute.xlu0 1
        %742 = vperm.xlu0 %741, %v359
        %v743 = vpop.permute.xlu0 %742
        %745 = vset.pattern.permute.xlu0 1
        %746 = vperm.xlu0 %745, %v360
        %v747 = vpop.permute.xlu0 %746
        %v749 = vsel %vm620, %v623, 0.0
        %v750 = vsel %vm620, %v627, 0.0
        %v751 = vsel %vm620, %v631, 0.0
        %v752 = vsel %vm620, %v635, 0.0
        %v753 = vsel %vm620, %v639, 0.0
        %v754 = vsel %vm620, %v643, 0.0
        %v755 = vsel %vm620, %v647, 0.0
        %v756 = vsel %vm620, %v651, 0.0
        %v757 = vsel %vm620, %v655, 0.0
        %v758 = vsel %vm620, %v659, 0.0
        %v759 = vsel %vm620, %v663, 0.0
        %v760 = vsel %vm620, %v667, 0.0
        %v761 = vsel %vm620, %v671, 0.0
        %v762 = vsel %vm620, %v675, 0.0
        %v763 = vsel %vm620, %v679, 0.0
        %v764 = vsel %vm620, %v683, 0.0
        %v765 = vsel %vm620, %v687, 0.0
        %v766 = vsel %vm620, %v691, 0.0
        %v767 = vsel %vm620, %v695, 0.0
        %v768 = vsel %vm620, %v699, 0.0
        %v769 = vsel %vm620, %v703, 0.0
        %v770 = vsel %vm620, %v707, 0.0
        %v771 = vsel %vm620, %v711, 0.0
        %v772 = vsel %vm620, %v715, 0.0
        %v773 = vsel %vm620, %v719, 0.0
        %v774 = vsel %vm620, %v723, 0.0
        %v775 = vsel %vm620, %v727, 0.0
        %v776 = vsel %vm620, %v731, 0.0
        %v777 = vsel %vm620, %v735, 0.0
        %v778 = vsel %vm620, %v739, 0.0
        %v779 = vsel %vm620, %v743, 0.0
        %v780 = vsel %vm620, %v747, 0.0
        %v781 = vadd.f32 %v588, %v749
        %v782 = vadd.f32 %v589, %v750
        %v783 = vadd.f32 %v590, %v751
        %v784 = vadd.f32 %v591, %v752
        %v785 = vadd.f32 %v592, %v753
        %v786 = vadd.f32 %v593, %v754
        %v787 = vadd.f32 %v594, %v755
        %v788 = vadd.f32 %v595, %v756
        %v789 = vadd.f32 %v596, %v757
        %v790 = vadd.f32 %v597, %v758
        %v791 = vadd.f32 %v598, %v759
        %v792 = vadd.f32 %v599, %v760
        %v793 = vadd.f32 %v600, %v761
        %v794 = vadd.f32 %v601, %v762
        %v795 = vadd.f32 %v602, %v763
        %v796 = vadd.f32 %v603, %v764
        %v797 = vadd.f32 %v604, %v765
        %v798 = vadd.f32 %v605, %v766
        %v799 = vadd.f32 %v606, %v767
        %v800 = vadd.f32 %v607, %v768
        %v801 = vadd.f32 %v608, %v769
        %v802 = vadd.f32 %v609, %v770
        %v803 = vadd.f32 %v610, %v771
        %v804 = vadd.f32 %v611, %v772
        %v805 = vadd.f32 %v612, %v773
        %v806 = vadd.f32 %v613, %v774
        %v807 = vadd.f32 %v614, %v775
        %v808 = vadd.f32 %v615, %v776
        %v809 = vadd.f32 %v616, %v777
        %v810 = vadd.f32 %v617, %v778
        %v811 = vadd.f32 %v618, %v779
        %v812 = vadd.f32 %v619, %v780
        %v813 = vsub.s32 %v394, 2
        %814 = vset.pattern.permute.xlu0 0
        %815 = vperm.xlu0 %814, %v361
        %v816 = vpop.permute.xlu0 %815
        %817 = vset.pattern.permute.xlu0 0
        %818 = vperm.xlu0 %817, %v362
        %v819 = vpop.permute.xlu0 %818
        %820 = vset.pattern.permute.xlu0 0
        %821 = vperm.xlu0 %820, %v363
        %v822 = vpop.permute.xlu0 %821
        %823 = vset.pattern.permute.xlu0 0
        %824 = vperm.xlu0 %823, %v364
        %v825 = vpop.permute.xlu0 %824
        %826 = vset.pattern.permute.xlu0 0
        %827 = vperm.xlu0 %826, %v365
        %v828 = vpop.permute.xlu0 %827
        %829 = vset.pattern.permute.xlu0 0
        %830 = vperm.xlu0 %829, %v366
        %v831 = vpop.permute.xlu0 %830
        %832 = vset.pattern.permute.xlu0 0
        %833 = vperm.xlu0 %832, %v367
        %v834 = vpop.permute.xlu0 %833
        %835 = vset.pattern.permute.xlu0 0
        %836 = vperm.xlu0 %835, %v368
        %v837 = vpop.permute.xlu0 %836
        %838 = vset.pattern.permute.xlu0 0
        %839 = vperm.xlu0 %838, %v369
        %v840 = vpop.permute.xlu0 %839
        %841 = vset.pattern.permute.xlu0 0
        %842 = vperm.xlu0 %841, %v370
        %v843 = vpop.permute.xlu0 %842
        %844 = vset.pattern.permute.xlu0 0
        %845 = vperm.xlu0 %844, %v371
        %v846 = vpop.permute.xlu0 %845
        %847 = vset.pattern.permute.xlu0 0
        %848 = vperm.xlu0 %847, %v372
        %v849 = vpop.permute.xlu0 %848
        %850 = vset.pattern.permute.xlu0 0
        %851 = vperm.xlu0 %850, %v373
        %v852 = vpop.permute.xlu0 %851
        %853 = vset.pattern.permute.xlu0 0
        %854 = vperm.xlu0 %853, %v374
        %v855 = vpop.permute.xlu0 %854
        %856 = vset.pattern.permute.xlu0 0
        %857 = vperm.xlu0 %856, %v375
        %v858 = vpop.permute.xlu0 %857
        %859 = vset.pattern.permute.xlu0 0
        %860 = vperm.xlu0 %859, %v376
        %v861 = vpop.permute.xlu0 %860
        %862 = vset.pattern.permute.xlu0 0
        %863 = vperm.xlu0 %862, %v377
        %v864 = vpop.permute.xlu0 %863
        %865 = vset.pattern.permute.xlu0 0
        %866 = vperm.xlu0 %865, %v378
        %v867 = vpop.permute.xlu0 %866
        %868 = vset.pattern.permute.xlu0 0
        %869 = vperm.xlu0 %868, %v379
        %v870 = vpop.permute.xlu0 %869
        %871 = vset.pattern.permute.xlu0 0
        %872 = vperm.xlu0 %871, %v380
        %v873 = vpop.permute.xlu0 %872
        %874 = vset.pattern.permute.xlu0 0
        %875 = vperm.xlu0 %874, %v381
        %v876 = vpop.permute.xlu0 %875
        %877 = vset.pattern.permute.xlu0 0
        %878 = vperm.xlu0 %877, %v382
        %v879 = vpop.permute.xlu0 %878
        %880 = vset.pattern.permute.xlu0 0
        %881 = vperm.xlu0 %880, %v383
        %v882 = vpop.permute.xlu0 %881
        %883 = vset.pattern.permute.xlu0 0
        %884 = vperm.xlu0 %883, %v384
        %v885 = vpop.permute.xlu0 %884
        %886 = vset.pattern.permute.xlu0 0
        %887 = vperm.xlu0 %886, %v385
        %v888 = vpop.permute.xlu0 %887
        %889 = vset.pattern.permute.xlu0 0
        %890 = vperm.xlu0 %889, %v386
        %v891 = vpop.permute.xlu0 %890
        %892 = vset.pattern.permute.xlu0 0
        %893 = vperm.xlu0 %892, %v387
        %v894 = vpop.permute.xlu0 %893
        %895 = vset.pattern.permute.xlu0 0
        %896 = vperm.xlu0 %895, %v388
        %v897 = vpop.permute.xlu0 %896
        %898 = vset.pattern.permute.xlu0 0
        %899 = vperm.xlu0 %898, %v389
        %v900 = vpop.permute.xlu0 %899
        %901 = vset.pattern.permute.xlu0 0
        %902 = vperm.xlu0 %901, %v390
        %v903 = vpop.permute.xlu0 %902
        %904 = vset.pattern.permute.xlu0 0
        %905 = vperm.xlu0 %904, %v391
        %v906 = vpop.permute.xlu0 %905
        %907 = vset.pattern.permute.xlu0 0
        %908 = vperm.xlu0 %907, %v392
        %v909 = vpop.permute.xlu0 %908
        %vm910 = vcmp.eq.s32.totalorder %v813, %v816
        %vm911 = vcmp.eq.s32.totalorder %v813, %v819
        %vm912 = vcmp.eq.s32.totalorder %v813, %v822
        %vm913 = vcmp.eq.s32.totalorder %v813, %v825
        %vm914 = vcmp.eq.s32.totalorder %v813, %v828
        %vm915 = vcmp.eq.s32.totalorder %v813, %v831
        %vm916 = vcmp.eq.s32.totalorder %v813, %v834
        %vm917 = vcmp.eq.s32.totalorder %v813, %v837
        %vm918 = vcmp.eq.s32.totalorder %v813, %v840
        %vm919 = vcmp.eq.s32.totalorder %v813, %v843
        %vm920 = vcmp.eq.s32.totalorder %v813, %v846
        %vm921 = vcmp.eq.s32.totalorder %v813, %v849
        %vm922 = vcmp.eq.s32.totalorder %v813, %v852
        %vm923 = vcmp.eq.s32.totalorder %v813, %v855
        %vm924 = vcmp.eq.s32.totalorder %v813, %v858
        %vm925 = vcmp.eq.s32.totalorder %v813, %v861
        %vm926 = vcmp.eq.s32.totalorder %v813, %v864
        %vm927 = vcmp.eq.s32.totalorder %v813, %v867
        %vm928 = vcmp.eq.s32.totalorder %v813, %v870
        %vm929 = vcmp.eq.s32.totalorder %v813, %v873
        %vm930 = vcmp.eq.s32.totalorder %v813, %v876
        %vm931 = vcmp.eq.s32.totalorder %v813, %v879
        %vm932 = vcmp.eq.s32.totalorder %v813, %v882
        %vm933 = vcmp.eq.s32.totalorder %v813, %v885
        %vm934 = vcmp.eq.s32.totalorder %v813, %v888
        %vm935 = vcmp.eq.s32.totalorder %v813, %v891
        %vm936 = vcmp.eq.s32.totalorder %v813, %v894
        %vm937 = vcmp.eq.s32.totalorder %v813, %v897
        %vm938 = vcmp.eq.s32.totalorder %v813, %v900
        %vm939 = vcmp.eq.s32.totalorder %v813, %v903
        %vm940 = vcmp.eq.s32.totalorder %v813, %v906
        %vm941 = vcmp.eq.s32.totalorder %v813, %v909
        %v942 = vsel %vm910, 1, 0
        %v943 = vsel %vm911, 1, 0
        %v944 = vsel %vm912, 1, 0
        %v945 = vsel %vm913, 1, 0
        %v946 = vsel %vm914, 1, 0
        %v947 = vsel %vm915, 1, 0
        %v948 = vsel %vm916, 1, 0
        %v949 = vsel %vm917, 1, 0
        %v950 = vsel %vm918, 1, 0
        %v951 = vsel %vm919, 1, 0
        %v952 = vsel %vm920, 1, 0
        %v953 = vsel %vm921, 1, 0
        %v954 = vsel %vm922, 1, 0
        %v955 = vsel %vm923, 1, 0
        %v956 = vsel %vm924, 1, 0
        %v957 = vsel %vm925, 1, 0
        %v958 = vsel %vm926, 1, 0
        %v959 = vsel %vm927, 1, 0
        %v960 = vsel %vm928, 1, 0
        %v961 = vsel %vm929, 1, 0
        %v962 = vsel %vm930, 1, 0
        %v963 = vsel %vm931, 1, 0
        %v964 = vsel %vm932, 1, 0
        %v965 = vsel %vm933, 1, 0
        %v966 = vsel %vm934, 1, 0
        %v967 = vsel %vm935, 1, 0
        %v968 = vsel %vm936, 1, 0
        %v969 = vsel %vm937, 1, 0
        %v970 = vsel %vm938, 1, 0
        %v971 = vsel %vm939, 1, 0
        %v972 = vsel %vm940, 1, 0
        %v973 = vsel %vm941, 1, 0
        %v974 = vcvt.s32.f32 %v942
        %v975 = vcvt.s32.f32 %v943
        %v976 = vcvt.s32.f32 %v944
        %v977 = vcvt.s32.f32 %v945
        %v978 = vcvt.s32.f32 %v946
        %v979 = vcvt.s32.f32 %v947
        %v980 = vcvt.s32.f32 %v948
        %v981 = vcvt.s32.f32 %v949
        %v982 = vcvt.s32.f32 %v950
        %v983 = vcvt.s32.f32 %v951
        %v984 = vcvt.s32.f32 %v952
        %v985 = vcvt.s32.f32 %v953
        %v986 = vcvt.s32.f32 %v954
        %v987 = vcvt.s32.f32 %v955
        %v988 = vcvt.s32.f32 %v956
        %v989 = vcvt.s32.f32 %v957
        %v990 = vcvt.s32.f32 %v958
        %v991 = vcvt.s32.f32 %v959
        %v992 = vcvt.s32.f32 %v960
        %v993 = vcvt.s32.f32 %v961
        %v994 = vcvt.s32.f32 %v962
        %v995 = vcvt.s32.f32 %v963
        %v996 = vcvt.s32.f32 %v964
        %v997 = vcvt.s32.f32 %v965
        %v998 = vcvt.s32.f32 %v966
        %v999 = vcvt.s32.f32 %v967
        %v1000 = vcvt.s32.f32 %v968
        %v1001 = vcvt.s32.f32 %v969
        %v1002 = vcvt.s32.f32 %v970
        %v1003 = vcvt.s32.f32 %v971
        %v1004 = vcvt.s32.f32 %v972
        %v1005 = vcvt.s32.f32 %v973
        %v1006 = vadd.f32 %v781, %v974
        %v1007 = vadd.f32 %v782, %v975
        %v1008 = vadd.f32 %v783, %v976
        %v1009 = vadd.f32 %v784, %v977
        %v1010 = vadd.f32 %v785, %v978
        %v1011 = vadd.f32 %v786, %v979
        %v1012 = vadd.f32 %v787, %v980
        %v1013 = vadd.f32 %v788, %v981
        %v1014 = vadd.f32 %v789, %v982
        %v1015 = vadd.f32 %v790, %v983
        %v1016 = vadd.f32 %v791, %v984
        %v1017 = vadd.f32 %v792, %v985
        %v1018 = vadd.f32 %v793, %v986
        %v1019 = vadd.f32 %v794, %v987
        %v1020 = vadd.f32 %v795, %v988
        %v1021 = vadd.f32 %v796, %v989
        %v1022 = vadd.f32 %v797, %v990
        %v1023 = vadd.f32 %v798, %v991
        %v1024 = vadd.f32 %v799, %v992
        %v1025 = vadd.f32 %v800, %v993
        %v1026 = vadd.f32 %v801, %v994
        %v1027 = vadd.f32 %v802, %v995
        %v1028 = vadd.f32 %v803, %v996
        %v1029 = vadd.f32 %v804, %v997
        %v1030 = vadd.f32 %v805, %v998
        %v1031 = vadd.f32 %v806, %v999
        %v1032 = vadd.f32 %v807, %v1000
        %v1033 = vadd.f32 %v808, %v1001
        %v1034 = vadd.f32 %v809, %v1002
        %v1035 = vadd.f32 %v810, %v1003
        %v1036 = vadd.f32 %v811, %v1004
        %v1037 = vadd.f32 %v812, %v1005
        %v1038 = vld [vmem:[%s2] sm:$0xff]
        %v1039 = vld [vmem:[%s2 + $0x8] sm:$0xff]
        %v1040 = vld [vmem:[%s2 + $0x10] sm:$0xff]
        %v1041 = vld [vmem:[%s2 + $0x18] sm:$0xff]
        %v1042 = vld [vmem:[%s2 + $0x20] sm:$0xff]
        %v1043 = vld [vmem:[%s2 + $0x28] sm:$0xff]
        %v1044 = vld [vmem:[%s2 + $0x30] sm:$0xff]
        %v1045 = vld [vmem:[%s2 + $0x38] sm:$0xff]
        %v1046 = vld [vmem:[%s3] sm:$0x3]
        %v1048 = vlaneseq
        %v1049 = vshrl.u32 %v1048, 7
        %v1050 = vsub.s32 0, %v1049
        %v1051 = vrot.slane %v1046, %v1050
        %v1052 = vlaneseq
        %v1053 = vshrl.u32 %v1052, 7
        %v1054 = vsub.s32 1, %v1053
        %v1055 = vrot.slane %v1046, %v1054
        %vm1058 = vcmask 261120
        %v1060 = vsel %vm1058, %v1006, 0
        %v1063 = vsel %vm1058, %v1007, 0
        %v1066 = vsel %vm1058, %v1008, 0
        %v1069 = vsel %vm1058, %v1009, 0
        %v1072 = vsel %vm1058, %v1010, 0
        %v1075 = vsel %vm1058, %v1011, 0
        %v1078 = vsel %vm1058, %v1012, 0
        %v1081 = vsel %vm1058, %v1013, 0
        %v1084 = vsel %vm1058, %v1014, 0
        %v1087 = vsel %vm1058, %v1015, 0
        %v1090 = vsel %vm1058, %v1016, 0
        %v1093 = vsel %vm1058, %v1017, 0
        %v1096 = vsel %vm1058, %v1018, 0
        %v1099 = vsel %vm1058, %v1019, 0
        %v1102 = vsel %vm1058, %v1020, 0
        %v1105 = vsel %vm1058, %v1021, 0
        %v1108 = vsel %vm1058, %v1022, 0
        %v1111 = vsel %vm1058, %v1023, 0
        %v1114 = vsel %vm1058, %v1024, 0
        %v1117 = vsel %vm1058, %v1025, 0
        %v1120 = vsel %vm1058, %v1026, 0
        %v1123 = vsel %vm1058, %v1027, 0
        %v1126 = vsel %vm1058, %v1028, 0
        %v1129 = vsel %vm1058, %v1029, 0
        %v1132 = vsel %vm1058, %v1030, 0
        %v1135 = vsel %vm1058, %v1031, 0
        %v1138 = vsel %vm1058, %v1032, 0
        %v1141 = vsel %vm1058, %v1033, 0
        %v1144 = vsel %vm1058, %v1034, 0
        %v1147 = vsel %vm1058, %v1035, 0
        %v1150 = vsel %vm1058, %v1036, 0
        %v1153 = vsel %vm1058, %v1037, 0
        %1155 = vmatprep.subr.mxu0 0.0
        %1156 = vmatpush1.msra.mxu0 0.0
        %1157 = vmatprep.subr.mxu0 0.0
        %1158 = vmatpush1.msra.mxu0 0.0
        %1159 = vmatprep.subr.mxu0 0.0
        %1160 = vmatpush1.msra.mxu0 0.0
        %1161 = vmatprep.subr.mxu0 0.0
        %1162 = vmatpush1.msra.mxu0 0.0
        %1163 = vmatprep.subr.mxu0 0.0
        %1164 = vmatpush1.msra.mxu0 0.0
        %1165 = vmatprep.subr.mxu0 0.0
        %1166 = vmatpush1.msra.mxu0 0.0
        %1167 = vmatprep.subr.mxu0 0.0
        %1168 = vmatpush1.msra.mxu0 0.0
        %1169 = vmatprep.subr.mxu0 0.0
        %1170 = vmatpush1.msra.mxu0 0.0
        %1171 = vmatprep.subr.mxu0 0.0
        %1172 = vmatpush1.msra.mxu0 0.0
        %1173 = vmatprep.subr.mxu0 0.0
        %1174 = vmatpush1.msra.mxu0 0.0
        %1175 = vmatprep.subr.mxu0 0.0
        %1176 = vmatpush1.msra.mxu0 0.0
        %1177 = vmatprep.subr.mxu0 0.0
        %1178 = vmatpush1.msra.mxu0 0.0
        %1179 = vmatprep.subr.mxu0 %v1045
        %1180 = vmatpush1.msra.mxu0 %v1044
        %1181 = vmatprep.subr.mxu0 %v1043
        %1182 = vmatpush1.msra.mxu0 %v1042
        %1183 = vmatprep.subr.mxu0 %v1041
        %1184 = vmatpush1.msra.mxu0 %v1040
        %1185 = vmatprep.subr.mxu0 %v1039
        %1186 = vmatpush1.msra.mxu0 %v1038
        %1187 = vmatprep.subr.mxu0 0.0
        %1188 = vmatpush2.msra.mxu0 0.0
        %1189 = vmatprep.subr.mxu0 0.0
        %1190 = vmatpush2.msra.mxu0 0.0
        %1191 = vmatprep.subr.mxu0 0.0
        %1192 = vmatpush2.msra.mxu0 0.0
        %1193 = vmatprep.subr.mxu0 0.0
        %1194 = vmatpush2.msra.mxu0 0.0
        %1195 = vmatprep.subr.mxu0 0.0
        %1196 = vmatpush2.msra.mxu0 0.0
        %1197 = vmatprep.subr.mxu0 0.0
        %1198 = vmatpush2.msra.mxu0 0.0
        %1199 = vmatprep.subr.mxu0 0.0
        %1200 = vmatpush2.msra.mxu0 0.0
        %1201 = vmatprep.subr.mxu0 0.0
        %1202 = vmatpush2.msra.mxu0 0.0
        %1203 = vmatprep.subr.mxu0 0.0
        %1204 = vmatpush2.msra.mxu0 0.0
        %1205 = vmatprep.subr.mxu0 0.0
        %1206 = vmatpush2.msra.mxu0 0.0
        %1207 = vmatprep.subr.mxu0 0.0
        %1208 = vmatpush2.msra.mxu0 0.0
        %1209 = vmatprep.subr.mxu0 0.0
        %1210 = vmatpush2.msra.mxu0 0.0
        %1211 = vmatprep.subr.mxu0 0.0
        %1212 = vmatpush2.msra.mxu0 0.0
        %1213 = vmatprep.subr.mxu0 0.0
        %1214 = vmatpush2.msra.mxu0 0.0
        %1215 = vmatprep.subr.mxu0 0.0
        %1216 = vmatpush2.msra.mxu0 0.0
        %1217 = vmatprep.subr.mxu0 0.0
        %1218 = vmatpush2.msra.mxu0 0.0
        %1219 = vmatprep.mubr.f32.mxu0 0.0
        %1220 = vmatmul.mubr.f32.gmra.mxu0 %v1060
        %v1221 = vpop.f32.mrf.mxu0
        %v1222 = vadd.f32 %v1051, %v1221
        %v1223 = vpop.f32.mrf.mxu0
        %v1224 = vadd.f32 %v1055, %v1223
        %1225 = vmatprep.mubr.f32.mxu0 0.0
        %1226 = vmatmul.mubr.f32.gmra.mxu0 %v1063
        %v1227 = vpop.f32.mrf.mxu0
        %v1228 = vadd.f32 %v1051, %v1227
        %v1229 = vpop.f32.mrf.mxu0
        %v1230 = vadd.f32 %v1055, %v1229
        %1231 = vmatprep.mubr.f32.mxu0 0.0
        %1232 = vmatmul.mubr.f32.gmra.mxu0 %v1066
        %v1233 = vpop.f32.mrf.mxu0
        %v1234 = vadd.f32 %v1051, %v1233
        %v1235 = vpop.f32.mrf.mxu0
        %v1236 = vadd.f32 %v1055, %v1235
        %1237 = vmatprep.mubr.f32.mxu0 0.0
        %1238 = vmatmul.mubr.f32.gmra.mxu0 %v1069
        %v1239 = vpop.f32.mrf.mxu0
        %v1240 = vadd.f32 %v1051, %v1239
        %v1241 = vpop.f32.mrf.mxu0
        %v1242 = vadd.f32 %v1055, %v1241
        %1243 = vmatprep.mubr.f32.mxu0 0.0
        %1244 = vmatmul.mubr.f32.gmra.mxu0 %v1072
        %v1245 = vpop.f32.mrf.mxu0
        %v1246 = vadd.f32 %v1051, %v1245
        %v1247 = vpop.f32.mrf.mxu0
        %v1248 = vadd.f32 %v1055, %v1247
        %1249 = vmatprep.mubr.f32.mxu0 0.0
        %1250 = vmatmul.mubr.f32.gmra.mxu0 %v1075
        %v1251 = vpop.f32.mrf.mxu0
        %v1252 = vadd.f32 %v1051, %v1251
        %v1253 = vpop.f32.mrf.mxu0
        %v1254 = vadd.f32 %v1055, %v1253
        %1255 = vmatprep.mubr.f32.mxu0 0.0
        %1256 = vmatmul.mubr.f32.gmra.mxu0 %v1078
        %v1257 = vpop.f32.mrf.mxu0
        %v1258 = vadd.f32 %v1051, %v1257
        %v1259 = vpop.f32.mrf.mxu0
        %v1260 = vadd.f32 %v1055, %v1259
        %1261 = vmatprep.mubr.f32.mxu0 0.0
        %1262 = vmatmul.mubr.f32.gmra.mxu0 %v1081
        %v1263 = vpop.f32.mrf.mxu0
        %v1264 = vadd.f32 %v1051, %v1263
        %v1265 = vpop.f32.mrf.mxu0
        %v1266 = vadd.f32 %v1055, %v1265
        %1267 = vmatprep.mubr.f32.mxu0 0.0
        %1268 = vmatmul.mubr.f32.gmra.mxu0 %v1084
        %v1269 = vpop.f32.mrf.mxu0
        %v1270 = vadd.f32 %v1051, %v1269
        %v1271 = vpop.f32.mrf.mxu0
        %v1272 = vadd.f32 %v1055, %v1271
        %1273 = vmatprep.mubr.f32.mxu0 0.0
        %1274 = vmatmul.mubr.f32.gmra.mxu0 %v1087
        %v1275 = vpop.f32.mrf.mxu0
        %v1276 = vadd.f32 %v1051, %v1275
        %v1277 = vpop.f32.mrf.mxu0
        %v1278 = vadd.f32 %v1055, %v1277
        %1279 = vmatprep.mubr.f32.mxu0 0.0
        %1280 = vmatmul.mubr.f32.gmra.mxu0 %v1090
        %v1281 = vpop.f32.mrf.mxu0
        %v1282 = vadd.f32 %v1051, %v1281
        %v1283 = vpop.f32.mrf.mxu0
        %v1284 = vadd.f32 %v1055, %v1283
        %1285 = vmatprep.mubr.f32.mxu0 0.0
        %1286 = vmatmul.mubr.f32.gmra.mxu0 %v1093
        %v1287 = vpop.f32.mrf.mxu0
        %v1288 = vadd.f32 %v1051, %v1287
        %v1289 = vpop.f32.mrf.mxu0
        %v1290 = vadd.f32 %v1055, %v1289
        %1291 = vmatprep.mubr.f32.mxu0 0.0
        %1292 = vmatmul.mubr.f32.gmra.mxu0 %v1096
        %v1293 = vpop.f32.mrf.mxu0
        %v1294 = vadd.f32 %v1051, %v1293
        %v1295 = vpop.f32.mrf.mxu0
        %v1296 = vadd.f32 %v1055, %v1295
        %1297 = vmatprep.mubr.f32.mxu0 0.0
        %1298 = vmatmul.mubr.f32.gmra.mxu0 %v1099
        %v1299 = vpop.f32.mrf.mxu0
        %v1300 = vadd.f32 %v1051, %v1299
        %v1301 = vpop.f32.mrf.mxu0
        %v1302 = vadd.f32 %v1055, %v1301
        %1303 = vmatprep.mubr.f32.mxu0 0.0
        %1304 = vmatmul.mubr.f32.gmra.mxu0 %v1102
        %v1305 = vpop.f32.mrf.mxu0
        %v1306 = vadd.f32 %v1051, %v1305
        %v1307 = vpop.f32.mrf.mxu0
        %v1308 = vadd.f32 %v1055, %v1307
        %1309 = vmatprep.mubr.f32.mxu0 0.0
        %1310 = vmatmul.mubr.f32.gmra.mxu0 %v1105
        %v1311 = vpop.f32.mrf.mxu0
        %v1312 = vadd.f32 %v1051, %v1311
        %v1313 = vpop.f32.mrf.mxu0
        %v1314 = vadd.f32 %v1055, %v1313
        %1315 = vmatprep.mubr.f32.mxu0 0.0
        %1316 = vmatmul.mubr.f32.gmra.mxu0 %v1108
        %v1317 = vpop.f32.mrf.mxu0
        %v1318 = vadd.f32 %v1051, %v1317
        %v1319 = vpop.f32.mrf.mxu0
        %v1320 = vadd.f32 %v1055, %v1319
        %1321 = vmatprep.mubr.f32.mxu0 0.0
        %1322 = vmatmul.mubr.f32.gmra.mxu0 %v1111
        %v1323 = vpop.f32.mrf.mxu0
        %v1324 = vadd.f32 %v1051, %v1323
        %v1325 = vpop.f32.mrf.mxu0
        %v1326 = vadd.f32 %v1055, %v1325
        %1327 = vmatprep.mubr.f32.mxu0 0.0
        %1328 = vmatmul.mubr.f32.gmra.mxu0 %v1114
        %v1329 = vpop.f32.mrf.mxu0
        %v1330 = vadd.f32 %v1051, %v1329
        %v1331 = vpop.f32.mrf.mxu0
        %v1332 = vadd.f32 %v1055, %v1331
        %1333 = vmatprep.mubr.f32.mxu0 0.0
        %1334 = vmatmul.mubr.f32.gmra.mxu0 %v1117
        %v1335 = vpop.f32.mrf.mxu0
        %v1336 = vadd.f32 %v1051, %v1335
        %v1337 = vpop.f32.mrf.mxu0
        %v1338 = vadd.f32 %v1055, %v1337
        %1339 = vmatprep.mubr.f32.mxu0 0.0
        %1340 = vmatmul.mubr.f32.gmra.mxu0 %v1120
        %v1341 = vpop.f32.mrf.mxu0
        %v1342 = vadd.f32 %v1051, %v1341
        %v1343 = vpop.f32.mrf.mxu0
        %v1344 = vadd.f32 %v1055, %v1343
        %1345 = vmatprep.mubr.f32.mxu0 0.0
        %1346 = vmatmul.mubr.f32.gmra.mxu0 %v1123
        %v1347 = vpop.f32.mrf.mxu0
        %v1348 = vadd.f32 %v1051, %v1347
        %v1349 = vpop.f32.mrf.mxu0
        %v1350 = vadd.f32 %v1055, %v1349
        %1351 = vmatprep.mubr.f32.mxu0 0.0
        %1352 = vmatmul.mubr.f32.gmra.mxu0 %v1126
        %v1353 = vpop.f32.mrf.mxu0
        %v1354 = vadd.f32 %v1051, %v1353
        %v1355 = vpop.f32.mrf.mxu0
        %v1356 = vadd.f32 %v1055, %v1355
        %1357 = vmatprep.mubr.f32.mxu0 0.0
        %1358 = vmatmul.mubr.f32.gmra.mxu0 %v1129
        %v1359 = vpop.f32.mrf.mxu0
        %v1360 = vadd.f32 %v1051, %v1359
        %v1361 = vpop.f32.mrf.mxu0
        %v1362 = vadd.f32 %v1055, %v1361
        %1363 = vmatprep.mubr.f32.mxu0 0.0
        %1364 = vmatmul.mubr.f32.gmra.mxu0 %v1132
        %v1365 = vpop.f32.mrf.mxu0
        %v1366 = vadd.f32 %v1051, %v1365
        %v1367 = vpop.f32.mrf.mxu0
        %v1368 = vadd.f32 %v1055, %v1367
        %1369 = vmatprep.mubr.f32.mxu0 0.0
        %1370 = vmatmul.mubr.f32.gmra.mxu0 %v1135
        %v1371 = vpop.f32.mrf.mxu0
        %v1372 = vadd.f32 %v1051, %v1371
        %v1373 = vpop.f32.mrf.mxu0
        %v1374 = vadd.f32 %v1055, %v1373
        %1375 = vmatprep.mubr.f32.mxu0 0.0
        %1376 = vmatmul.mubr.f32.gmra.mxu0 %v1138
        %v1377 = vpop.f32.mrf.mxu0
        %v1378 = vadd.f32 %v1051, %v1377
        %v1379 = vpop.f32.mrf.mxu0
        %v1380 = vadd.f32 %v1055, %v1379
        %1381 = vmatprep.mubr.f32.mxu0 0.0
        %1382 = vmatmul.mubr.f32.gmra.mxu0 %v1141
        %v1383 = vpop.f32.mrf.mxu0
        %v1384 = vadd.f32 %v1051, %v1383
        %v1385 = vpop.f32.mrf.mxu0
        %v1386 = vadd.f32 %v1055, %v1385
        %1387 = vmatprep.mubr.f32.mxu0 0.0
        %1388 = vmatmul.mubr.f32.gmra.mxu0 %v1144
        %v1389 = vpop.f32.mrf.mxu0
        %v1390 = vadd.f32 %v1051, %v1389
        %v1391 = vpop.f32.mrf.mxu0
        %v1392 = vadd.f32 %v1055, %v1391
        %1393 = vmatprep.mubr.f32.mxu0 0.0
        %1394 = vmatmul.mubr.f32.gmra.mxu0 %v1147
        %v1395 = vpop.f32.mrf.mxu0
        %v1396 = vadd.f32 %v1051, %v1395
        %v1397 = vpop.f32.mrf.mxu0
        %v1398 = vadd.f32 %v1055, %v1397
        %1399 = vmatprep.mubr.f32.mxu0 0.0
        %1400 = vmatmul.mubr.f32.gmra.mxu0 %v1150
        %v1401 = vpop.f32.mrf.mxu0
        %v1402 = vadd.f32 %v1051, %v1401
        %v1403 = vpop.f32.mrf.mxu0
        %v1404 = vadd.f32 %v1055, %v1403
        %1405 = vmatprep.mubr.f32.mxu0 0.0
        %1406 = vmatmul.mubr.f32.gmra.mxu0 %v1153
        %v1407 = vpop.f32.mrf.mxu0
        %v1408 = vadd.f32 %v1051, %v1407
        %v1409 = vpop.f32.mrf.mxu0
        %v1410 = vadd.f32 %v1055, %v1409
        %1411 = vdwg.mxu0
        %v1412 = vmax.f32 %v1222, 0.0
        %v1413 = vmax.f32 %v1224, 0.0
        %v1414 = vmax.f32 %v1228, 0.0
        %v1415 = vmax.f32 %v1230, 0.0
        %v1416 = vmax.f32 %v1234, 0.0
        %v1417 = vmax.f32 %v1236, 0.0
        %v1418 = vmax.f32 %v1240, 0.0
        %v1419 = vmax.f32 %v1242, 0.0
        %v1420 = vmax.f32 %v1246, 0.0
        %v1421 = vmax.f32 %v1248, 0.0
        %v1422 = vmax.f32 %v1252, 0.0
        %v1423 = vmax.f32 %v1254, 0.0
        %v1424 = vmax.f32 %v1258, 0.0
        %v1425 = vmax.f32 %v1260, 0.0
        %v1426 = vmax.f32 %v1264, 0.0
        %v1427 = vmax.f32 %v1266, 0.0
        %v1428 = vmax.f32 %v1270, 0.0
        %v1429 = vmax.f32 %v1272, 0.0
        %v1430 = vmax.f32 %v1276, 0.0
        %v1431 = vmax.f32 %v1278, 0.0
        %v1432 = vmax.f32 %v1282, 0.0
        %v1433 = vmax.f32 %v1284, 0.0
        %v1434 = vmax.f32 %v1288, 0.0
        %v1435 = vmax.f32 %v1290, 0.0
        %v1436 = vmax.f32 %v1294, 0.0
        %v1437 = vmax.f32 %v1296, 0.0
        %v1438 = vmax.f32 %v1300, 0.0
        %v1439 = vmax.f32 %v1302, 0.0
        %v1440 = vmax.f32 %v1306, 0.0
        %v1441 = vmax.f32 %v1308, 0.0
        %v1442 = vmax.f32 %v1312, 0.0
        %v1443 = vmax.f32 %v1314, 0.0
        %v1444 = vmax.f32 %v1318, 0.0
        %v1445 = vmax.f32 %v1320, 0.0
        %v1446 = vmax.f32 %v1324, 0.0
        %v1447 = vmax.f32 %v1326, 0.0
        %v1448 = vmax.f32 %v1330, 0.0
        %v1449 = vmax.f32 %v1332, 0.0
        %v1450 = vmax.f32 %v1336, 0.0
        %v1451 = vmax.f32 %v1338, 0.0
        %v1452 = vmax.f32 %v1342, 0.0
        %v1453 = vmax.f32 %v1344, 0.0
        %v1454 = vmax.f32 %v1348, 0.0
        %v1455 = vmax.f32 %v1350, 0.0
        %v1456 = vmax.f32 %v1354, 0.0
        %v1457 = vmax.f32 %v1356, 0.0
        %v1458 = vmax.f32 %v1360, 0.0
        %v1459 = vmax.f32 %v1362, 0.0
        %v1460 = vmax.f32 %v1366, 0.0
        %v1461 = vmax.f32 %v1368, 0.0
        %v1462 = vmax.f32 %v1372, 0.0
        %v1463 = vmax.f32 %v1374, 0.0
        %v1464 = vmax.f32 %v1378, 0.0
        %v1465 = vmax.f32 %v1380, 0.0
        %v1466 = vmax.f32 %v1384, 0.0
        %v1467 = vmax.f32 %v1386, 0.0
        %v1468 = vmax.f32 %v1390, 0.0
        %v1469 = vmax.f32 %v1392, 0.0
        %v1470 = vmax.f32 %v1396, 0.0
        %v1471 = vmax.f32 %v1398, 0.0
        %v1472 = vmax.f32 %v1402, 0.0
        %v1473 = vmax.f32 %v1404, 0.0
        %v1474 = vmax.f32 %v1408, 0.0
        %v1475 = vmax.f32 %v1410, 0.0
        %v1476 = vpack.c.bf16 %v1414, %v1412
        %v1477 = vpack.c.bf16 %v1415, %v1413
        %v1478 = vpack.c.bf16 %v1418, %v1416
        %v1479 = vpack.c.bf16 %v1419, %v1417
        %v1480 = vpack.c.bf16 %v1422, %v1420
        %v1481 = vpack.c.bf16 %v1423, %v1421
        %v1482 = vpack.c.bf16 %v1426, %v1424
        %v1483 = vpack.c.bf16 %v1427, %v1425
        %v1484 = vpack.c.bf16 %v1430, %v1428
        %v1485 = vpack.c.bf16 %v1431, %v1429
        %v1486 = vpack.c.bf16 %v1434, %v1432
        %v1487 = vpack.c.bf16 %v1435, %v1433
        %v1488 = vpack.c.bf16 %v1438, %v1436
        %v1489 = vpack.c.bf16 %v1439, %v1437
        %v1490 = vpack.c.bf16 %v1442, %v1440
        %v1491 = vpack.c.bf16 %v1443, %v1441
        %v1492 = vpack.c.bf16 %v1446, %v1444
        %v1493 = vpack.c.bf16 %v1447, %v1445
        %v1494 = vpack.c.bf16 %v1450, %v1448
        %v1495 = vpack.c.bf16 %v1451, %v1449
        %v1496 = vpack.c.bf16 %v1454, %v1452
        %v1497 = vpack.c.bf16 %v1455, %v1453
        %v1498 = vpack.c.bf16 %v1458, %v1456
        %v1499 = vpack.c.bf16 %v1459, %v1457
        %v1500 = vpack.c.bf16 %v1462, %v1460
        %v1501 = vpack.c.bf16 %v1463, %v1461
        %v1502 = vpack.c.bf16 %v1466, %v1464
        %v1503 = vpack.c.bf16 %v1467, %v1465
        %v1504 = vpack.c.bf16 %v1470, %v1468
        %v1505 = vpack.c.bf16 %v1471, %v1469
        %v1506 = vpack.c.bf16 %v1474, %v1472
        %v1507 = vpack.c.bf16 %v1475, %v1473
        %v1508 = vld [vmem:[%s4] sm:$0xff]
        %v1509 = vld [vmem:[%s4 + $0x8] sm:$0xff]
        %v1510 = vld [vmem:[%s4 + $0x10] sm:$0xff]
        %v1511 = vld [vmem:[%s4 + $0x18] sm:$0xff]
        %v1512 = vld [vmem:[%s4 + $0x20] sm:$0xff]
        %v1513 = vld [vmem:[%s4 + $0x28] sm:$0xff]
        %v1514 = vld [vmem:[%s4 + $0x30] sm:$0xff]
        %v1515 = vld [vmem:[%s4 + $0x38] sm:$0xff]
        %v1516 = vld [vmem:[%s4 + $0x40] sm:$0xff]
        %v1517 = vld [vmem:[%s4 + $0x48] sm:$0xff]
        %v1518 = vld [vmem:[%s4 + $0x50] sm:$0xff]
        %v1519 = vld [vmem:[%s4 + $0x58] sm:$0xff]
        %v1520 = vld [vmem:[%s4 + $0x60] sm:$0xff]
        %v1521 = vld [vmem:[%s4 + $0x68] sm:$0xff]
        %v1522 = vld [vmem:[%s4 + $0x70] sm:$0xff]
        %v1523 = vld [vmem:[%s4 + $0x78] sm:$0xff]
        %v1524 = vld [vmem:[%s4 + $0x80] sm:$0xff]
        %v1525 = vld [vmem:[%s4 + $0x88] sm:$0xff]
        %v1526 = vld [vmem:[%s4 + $0x90] sm:$0xff]
        %v1527 = vld [vmem:[%s4 + $0x98] sm:$0xff]
        %v1528 = vld [vmem:[%s4 + $0xa0] sm:$0xff]
        %v1529 = vld [vmem:[%s4 + $0xa8] sm:$0xff]
        %v1530 = vld [vmem:[%s4 + $0xb0] sm:$0xff]
        %v1531 = vld [vmem:[%s4 + $0xb8] sm:$0xff]
        %v1532 = vld [vmem:[%s4 + $0xc0] sm:$0xff]
        %v1533 = vld [vmem:[%s4 + $0xc8] sm:$0xff]
        %v1534 = vld [vmem:[%s4 + $0xd0] sm:$0xff]
        %v1535 = vld [vmem:[%s4 + $0xd8] sm:$0xff]
        %v1536 = vld [vmem:[%s4 + $0xe0] sm:$0xff]
        %v1537 = vld [vmem:[%s4 + $0xe8] sm:$0xff]
        %v1538 = vld [vmem:[%s4 + $0xf0] sm:$0xff]
        %v1539 = vld [vmem:[%s4 + $0xf8] sm:$0xff]
        %v1540 = vld [vmem:[%s5] sm:$0x3]
        %v1542 = vlaneseq
        %v1543 = vshrl.u32 %v1542, 7
        %v1544 = vsub.s32 0, %v1543
        %v1545 = vrot.slane %v1540, %v1544
        %v1546 = vlaneseq
        %v1547 = vshrl.u32 %v1546, 7
        %v1548 = vsub.s32 1, %v1547
        %v1549 = vrot.slane %v1540, %v1548
        %v1584 = vunpack.c.l.b16 %v1508
        %v1585 = vunpack.c.h.b16 %v1508
        %v1586 = vunpack.c.l.b16 %v1509
        %v1587 = vunpack.c.h.b16 %v1509
        %v1588 = vunpack.c.l.b16 %v1510
        %v1589 = vunpack.c.h.b16 %v1510
        %v1590 = vunpack.c.l.b16 %v1511
        %v1591 = vunpack.c.h.b16 %v1511
        %v1592 = vunpack.c.l.b16 %v1512
        %v1593 = vunpack.c.h.b16 %v1512
        %v1594 = vunpack.c.l.b16 %v1513
        %v1595 = vunpack.c.h.b16 %v1513
        %v1596 = vunpack.c.l.b16 %v1514
        %v1597 = vunpack.c.h.b16 %v1514
        %v1598 = vunpack.c.l.b16 %v1515
        %v1599 = vunpack.c.h.b16 %v1515
        %v1600 = vunpack.c.l.b16 %v1516
        %v1601 = vunpack.c.h.b16 %v1516
        %v1602 = vunpack.c.l.b16 %v1517
        %v1603 = vunpack.c.h.b16 %v1517
        %v1604 = vunpack.c.l.b16 %v1518
        %v1605 = vunpack.c.h.b16 %v1518
        %v1606 = vunpack.c.l.b16 %v1519
        %v1607 = vunpack.c.h.b16 %v1519
        %v1608 = vunpack.c.l.b16 %v1520
        %v1609 = vunpack.c.h.b16 %v1520
        %v1610 = vunpack.c.l.b16 %v1521
        %v1611 = vunpack.c.h.b16 %v1521
        %v1612 = vunpack.c.l.b16 %v1522
        %v1613 = vunpack.c.h.b16 %v1522
        %v1614 = vunpack.c.l.b16 %v1523
        %v1615 = vunpack.c.h.b16 %v1523
        %v1616 = vunpack.c.l.b16 %v1524
        %v1617 = vunpack.c.h.b16 %v1524
        %v1618 = vunpack.c.l.b16 %v1525
        %v1619 = vunpack.c.h.b16 %v1525
        %v1620 = vunpack.c.l.b16 %v1526
        %v1621 = vunpack.c.h.b16 %v1526
        %v1622 = vunpack.c.l.b16 %v1527
        %v1623 = vunpack.c.h.b16 %v1527
        %v1624 = vunpack.c.l.b16 %v1528
        %v1625 = vunpack.c.h.b16 %v1528
        %v1626 = vunpack.c.l.b16 %v1529
        %v1627 = vunpack.c.h.b16 %v1529
        %v1628 = vunpack.c.l.b16 %v1530
        %v1629 = vunpack.c.h.b16 %v1530
        %v1630 = vunpack.c.l.b16 %v1531
        %v1631 = vunpack.c.h.b16 %v1531
        %v1632 = vunpack.c.l.b16 %v1532
        %v1633 = vunpack.c.h.b16 %v1532
        %v1634 = vunpack.c.l.b16 %v1533
        %v1635 = vunpack.c.h.b16 %v1533
        %v1636 = vunpack.c.l.b16 %v1534
        %v1637 = vunpack.c.h.b16 %v1534
        %v1638 = vunpack.c.l.b16 %v1535
        %v1639 = vunpack.c.h.b16 %v1535
        %v1640 = vunpack.c.l.b16 %v1536
        %v1641 = vunpack.c.h.b16 %v1536
        %v1642 = vunpack.c.l.b16 %v1537
        %v1643 = vunpack.c.h.b16 %v1537
        %v1644 = vunpack.c.l.b16 %v1538
        %v1645 = vunpack.c.h.b16 %v1538
        %v1646 = vunpack.c.l.b16 %v1539
        %v1647 = vunpack.c.h.b16 %v1539
        %v1648 = vpack.c.b16 %v1586, %v1584
        %v1649 = vpack.c.b16 %v1587, %v1585
        %v1650 = vpack.c.b16 %v1590, %v1588
        %v1651 = vpack.c.b16 %v1591, %v1589
        %v1652 = vpack.c.b16 %v1594, %v1592
        %v1653 = vpack.c.b16 %v1595, %v1593
        %v1654 = vpack.c.b16 %v1598, %v1596
        %v1655 = vpack.c.b16 %v1599, %v1597
        %v1656 = vpack.c.b16 %v1602, %v1600
        %v1657 = vpack.c.b16 %v1603, %v1601
        %v1658 = vpack.c.b16 %v1606, %v1604
        %v1659 = vpack.c.b16 %v1607, %v1605
        %v1660 = vpack.c.b16 %v1610, %v1608
        %v1661 = vpack.c.b16 %v1611, %v1609
        %v1662 = vpack.c.b16 %v1614, %v1612
        %v1663 = vpack.c.b16 %v1615, %v1613
        %v1664 = vpack.c.b16 %v1618, %v1616
        %v1665 = vpack.c.b16 %v1619, %v1617
        %v1666 = vpack.c.b16 %v1622, %v1620
        %v1667 = vpack.c.b16 %v1623, %v1621
        %v1668 = vpack.c.b16 %v1626, %v1624
        %v1669 = vpack.c.b16 %v1627, %v1625
        %v1670 = vpack.c.b16 %v1630, %v1628
        %v1671 = vpack.c.b16 %v1631, %v1629
        %v1672 = vpack.c.b16 %v1634, %v1632
        %v1673 = vpack.c.b16 %v1635, %v1633
        %v1674 = vpack.c.b16 %v1638, %v1636
        %v1675 = vpack.c.b16 %v1639, %v1637
        %v1676 = vpack.c.b16 %v1642, %v1640
        %v1677 = vpack.c.b16 %v1643, %v1641
        %v1678 = vpack.c.b16 %v1646, %v1644
        %v1679 = vpack.c.b16 %v1647, %v1645
        %1712 = vmatprep.subr.bf16.mxu0 %v1663
        %1713 = vmatpush1.bf16.msra.mxu0 %v1662
        %1714 = vmatprep.subr.bf16.mxu0 %v1661
        %1715 = vmatpush1.bf16.msra.mxu0 %v1660
        %1716 = vmatprep.subr.bf16.mxu0 %v1659
        %1717 = vmatpush1.bf16.msra.mxu0 %v1658
        %1718 = vmatprep.subr.bf16.mxu0 %v1657
        %1719 = vmatpush1.bf16.msra.mxu0 %v1656
        %1720 = vmatprep.subr.bf16.mxu0 %v1655
        %1721 = vmatpush1.bf16.msra.mxu0 %v1654
        %1722 = vmatprep.subr.bf16.mxu0 %v1653
        %1723 = vmatpush1.bf16.msra.mxu0 %v1652
        %1724 = vmatprep.subr.bf16.mxu0 %v1651
        %1725 = vmatpush1.bf16.msra.mxu0 %v1650
        %1726 = vmatprep.subr.bf16.mxu0 %v1649
        %1727 = vmatpush1.bf16.msra.mxu0 %v1648
        %1728 = vmatprep.subr.bf16.mxu0 %v1679
        %1729 = vmatpush2.bf16.msra.mxu0 %v1678
        %1730 = vmatprep.subr.bf16.mxu0 %v1677
        %1731 = vmatpush2.bf16.msra.mxu0 %v1676
        %1732 = vmatprep.subr.bf16.mxu0 %v1675
        %1733 = vmatpush2.bf16.msra.mxu0 %v1674
        %1734 = vmatprep.subr.bf16.mxu0 %v1673
        %1735 = vmatpush2.bf16.msra.mxu0 %v1672
        %1736 = vmatprep.subr.bf16.mxu0 %v1671
        %1737 = vmatpush2.bf16.msra.mxu0 %v1670
        %1738 = vmatprep.subr.bf16.mxu0 %v1669
        %1739 = vmatpush2.bf16.msra.mxu0 %v1668
        %1740 = vmatprep.subr.bf16.mxu0 %v1667
        %1741 = vmatpush2.bf16.msra.mxu0 %v1666
        %1742 = vmatprep.subr.bf16.mxu0 %v1665
        %1743 = vmatpush2.bf16.msra.mxu0 %v1664
        %1744 = vmatprep.mubr.bf16.mxu0 %v1477
        %1745 = vmatmul.mubr.bf16.gmra.mxu0 %v1476
        %v1746 = vpop.f32.mrf.mxu0
        %v1747 = vadd.f32 %v1545, %v1746
        %v1748 = vpop.f32.mrf.mxu0
        %v1749 = vadd.f32 %v1549, %v1748
        %v1750 = vpop.f32.mrf.mxu0
        %v1751 = vadd.f32 %v1545, %v1750
        %v1752 = vpop.f32.mrf.mxu0
        %v1753 = vadd.f32 %v1549, %v1752
        %1754 = vmatprep.mubr.bf16.mxu0 %v1479
        %1755 = vmatmul.mubr.bf16.gmra.mxu0 %v1478
        %v1756 = vpop.f32.mrf.mxu0
        %v1757 = vadd.f32 %v1545, %v1756
        %v1758 = vpop.f32.mrf.mxu0
        %v1759 = vadd.f32 %v1549, %v1758
        %v1760 = vpop.f32.mrf.mxu0
        %v1761 = vadd.f32 %v1545, %v1760
        %v1762 = vpop.f32.mrf.mxu0
        %v1763 = vadd.f32 %v1549, %v1762
        %1764 = vmatprep.mubr.bf16.mxu0 %v1481
        %1765 = vmatmul.mubr.bf16.gmra.mxu0 %v1480
        %v1766 = vpop.f32.mrf.mxu0
        %v1767 = vadd.f32 %v1545, %v1766
        %v1768 = vpop.f32.mrf.mxu0
        %v1769 = vadd.f32 %v1549, %v1768
        %v1770 = vpop.f32.mrf.mxu0
        %v1771 = vadd.f32 %v1545, %v1770
        %v1772 = vpop.f32.mrf.mxu0
        %v1773 = vadd.f32 %v1549, %v1772
        %1774 = vmatprep.mubr.bf16.mxu0 %v1483
        %1775 = vmatmul.mubr.bf16.gmra.mxu0 %v1482
        %v1776 = vpop.f32.mrf.mxu0
        %v1777 = vadd.f32 %v1545, %v1776
        %v1778 = vpop.f32.mrf.mxu0
        %v1779 = vadd.f32 %v1549, %v1778
        %v1780 = vpop.f32.mrf.mxu0
        %v1781 = vadd.f32 %v1545, %v1780
        %v1782 = vpop.f32.mrf.mxu0
        %v1783 = vadd.f32 %v1549, %v1782
        %1784 = vmatprep.mubr.bf16.mxu0 %v1485
        %1785 = vmatmul.mubr.bf16.gmra.mxu0 %v1484
        %v1786 = vpop.f32.mrf.mxu0
        %v1787 = vadd.f32 %v1545, %v1786
        %v1788 = vpop.f32.mrf.mxu0
        %v1789 = vadd.f32 %v1549, %v1788
        %v1790 = vpop.f32.mrf.mxu0
        %v1791 = vadd.f32 %v1545, %v1790
        %v1792 = vpop.f32.mrf.mxu0
        %v1793 = vadd.f32 %v1549, %v1792
        %1794 = vmatprep.mubr.bf16.mxu0 %v1487
        %1795 = vmatmul.mubr.bf16.gmra.mxu0 %v1486
        %v1796 = vpop.f32.mrf.mxu0
        %v1797 = vadd.f32 %v1545, %v1796
        %v1798 = vpop.f32.mrf.mxu0
        %v1799 = vadd.f32 %v1549, %v1798
        %v1800 = vpop.f32.mrf.mxu0
        %v1801 = vadd.f32 %v1545, %v1800
        %v1802 = vpop.f32.mrf.mxu0
        %v1803 = vadd.f32 %v1549, %v1802
        %1804 = vmatprep.mubr.bf16.mxu0 %v1489
        %1805 = vmatmul.mubr.bf16.gmra.mxu0 %v1488
        %v1806 = vpop.f32.mrf.mxu0
        %v1807 = vadd.f32 %v1545, %v1806
        %v1808 = vpop.f32.mrf.mxu0
        %v1809 = vadd.f32 %v1549, %v1808
        %v1810 = vpop.f32.mrf.mxu0
        %v1811 = vadd.f32 %v1545, %v1810
        %v1812 = vpop.f32.mrf.mxu0
        %v1813 = vadd.f32 %v1549, %v1812
        %1814 = vmatprep.mubr.bf16.mxu0 %v1491
        %1815 = vmatmul.mubr.bf16.gmra.mxu0 %v1490
        %v1816 = vpop.f32.mrf.mxu0
        %v1817 = vadd.f32 %v1545, %v1816
        %v1818 = vpop.f32.mrf.mxu0
        %v1819 = vadd.f32 %v1549, %v1818
        %v1820 = vpop.f32.mrf.mxu0
        %v1821 = vadd.f32 %v1545, %v1820
        %v1822 = vpop.f32.mrf.mxu0
        %v1823 = vadd.f32 %v1549, %v1822
        %1824 = vmatprep.mubr.bf16.mxu0 %v1493
        %1825 = vmatmul.mubr.bf16.gmra.mxu0 %v1492
        %v1826 = vpop.f32.mrf.mxu0
        %v1827 = vadd.f32 %v1545, %v1826
        %v1828 = vpop.f32.mrf.mxu0
        %v1829 = vadd.f32 %v1549, %v1828
        %v1830 = vpop.f32.mrf.mxu0
        %v1831 = vadd.f32 %v1545, %v1830
        %v1832 = vpop.f32.mrf.mxu0
        %v1833 = vadd.f32 %v1549, %v1832
        %1834 = vmatprep.mubr.bf16.mxu0 %v1495
        %1835 = vmatmul.mubr.bf16.gmra.mxu0 %v1494
        %v1836 = vpop.f32.mrf.mxu0
        %v1837 = vadd.f32 %v1545, %v1836
        %v1838 = vpop.f32.mrf.mxu0
        %v1839 = vadd.f32 %v1549, %v1838
        %v1840 = vpop.f32.mrf.mxu0
        %v1841 = vadd.f32 %v1545, %v1840
        %v1842 = vpop.f32.mrf.mxu0
        %v1843 = vadd.f32 %v1549, %v1842
        %1844 = vmatprep.mubr.bf16.mxu0 %v1497
        %1845 = vmatmul.mubr.bf16.gmra.mxu0 %v1496
        %v1846 = vpop.f32.mrf.mxu0
        %v1847 = vadd.f32 %v1545, %v1846
        %v1848 = vpop.f32.mrf.mxu0
        %v1849 = vadd.f32 %v1549, %v1848
        %v1850 = vpop.f32.mrf.mxu0
        %v1851 = vadd.f32 %v1545, %v1850
        %v1852 = vpop.f32.mrf.mxu0
        %v1853 = vadd.f32 %v1549, %v1852
        %1854 = vmatprep.mubr.bf16.mxu0 %v1499
        %1855 = vmatmul.mubr.bf16.gmra.mxu0 %v1498
        %v1856 = vpop.f32.mrf.mxu0
        %v1857 = vadd.f32 %v1545, %v1856
        %v1858 = vpop.f32.mrf.mxu0
        %v1859 = vadd.f32 %v1549, %v1858
        %v1860 = vpop.f32.mrf.mxu0
        %v1861 = vadd.f32 %v1545, %v1860
        %v1862 = vpop.f32.mrf.mxu0
        %v1863 = vadd.f32 %v1549, %v1862
        %1864 = vmatprep.mubr.bf16.mxu0 %v1501
        %1865 = vmatmul.mubr.bf16.gmra.mxu0 %v1500
        %v1866 = vpop.f32.mrf.mxu0
        %v1867 = vadd.f32 %v1545, %v1866
        %v1868 = vpop.f32.mrf.mxu0
        %v1869 = vadd.f32 %v1549, %v1868
        %v1870 = vpop.f32.mrf.mxu0
        %v1871 = vadd.f32 %v1545, %v1870
        %v1872 = vpop.f32.mrf.mxu0
        %v1873 = vadd.f32 %v1549, %v1872
        %1874 = vmatprep.mubr.bf16.mxu0 %v1503
        %1875 = vmatmul.mubr.bf16.gmra.mxu0 %v1502
        %v1876 = vpop.f32.mrf.mxu0
        %v1877 = vadd.f32 %v1545, %v1876
        %v1878 = vpop.f32.mrf.mxu0
        %v1879 = vadd.f32 %v1549, %v1878
        %v1880 = vpop.f32.mrf.mxu0
        %v1881 = vadd.f32 %v1545, %v1880
        %v1882 = vpop.f32.mrf.mxu0
        %v1883 = vadd.f32 %v1549, %v1882
        %1884 = vmatprep.mubr.bf16.mxu0 %v1505
        %1885 = vmatmul.mubr.bf16.gmra.mxu0 %v1504
        %v1886 = vpop.f32.mrf.mxu0
        %v1887 = vadd.f32 %v1545, %v1886
        %v1888 = vpop.f32.mrf.mxu0
        %v1889 = vadd.f32 %v1549, %v1888
        %v1890 = vpop.f32.mrf.mxu0
        %v1891 = vadd.f32 %v1545, %v1890
        %v1892 = vpop.f32.mrf.mxu0
        %v1893 = vadd.f32 %v1549, %v1892
        %1894 = vmatprep.mubr.bf16.mxu0 %v1507
        %1895 = vmatmul.mubr.bf16.gmra.mxu0 %v1506
        %v1896 = vpop.f32.mrf.mxu0
        %v1897 = vadd.f32 %v1545, %v1896
        %v1898 = vpop.f32.mrf.mxu0
        %v1899 = vadd.f32 %v1549, %v1898
        %v1900 = vpop.f32.mrf.mxu0
        %v1901 = vadd.f32 %v1545, %v1900
        %v1902 = vpop.f32.mrf.mxu0
        %v1903 = vadd.f32 %v1549, %v1902
        %1904 = vdwg.mxu0
        %v1905 = vmax.f32 %v1747, 0.0
        %v1906 = vmax.f32 %v1749, 0.0
        %v1907 = vmax.f32 %v1751, 0.0
        %v1908 = vmax.f32 %v1753, 0.0
        %v1909 = vmax.f32 %v1757, 0.0
        %v1910 = vmax.f32 %v1759, 0.0
        %v1911 = vmax.f32 %v1761, 0.0
        %v1912 = vmax.f32 %v1763, 0.0
        %v1913 = vmax.f32 %v1767, 0.0
        %v1914 = vmax.f32 %v1769, 0.0
        %v1915 = vmax.f32 %v1771, 0.0
        %v1916 = vmax.f32 %v1773, 0.0
        %v1917 = vmax.f32 %v1777, 0.0
        %v1918 = vmax.f32 %v1779, 0.0
        %v1919 = vmax.f32 %v1781, 0.0
        %v1920 = vmax.f32 %v1783, 0.0
        %v1921 = vmax.f32 %v1787, 0.0
        %v1922 = vmax.f32 %v1789, 0.0
        %v1923 = vmax.f32 %v1791, 0.0
        %v1924 = vmax.f32 %v1793, 0.0
        %v1925 = vmax.f32 %v1797, 0.0
        %v1926 = vmax.f32 %v1799, 0.0
        %v1927 = vmax.f32 %v1801, 0.0
        %v1928 = vmax.f32 %v1803, 0.0
        %v1929 = vmax.f32 %v1807, 0.0
        %v1930 = vmax.f32 %v1809, 0.0
        %v1931 = vmax.f32 %v1811, 0.0
        %v1932 = vmax.f32 %v1813, 0.0
        %v1933 = vmax.f32 %v1817, 0.0
        %v1934 = vmax.f32 %v1819, 0.0
        %v1935 = vmax.f32 %v1821, 0.0
        %v1936 = vmax.f32 %v1823, 0.0
        %v1937 = vmax.f32 %v1827, 0.0
        %v1938 = vmax.f32 %v1829, 0.0
        %v1939 = vmax.f32 %v1831, 0.0
        %v1940 = vmax.f32 %v1833, 0.0
        %v1941 = vmax.f32 %v1837, 0.0
        %v1942 = vmax.f32 %v1839, 0.0
        %v1943 = vmax.f32 %v1841, 0.0
        %v1944 = vmax.f32 %v1843, 0.0
        %v1945 = vmax.f32 %v1847, 0.0
        %v1946 = vmax.f32 %v1849, 0.0
        %v1947 = vmax.f32 %v1851, 0.0
        %v1948 = vmax.f32 %v1853, 0.0
        %v1949 = vmax.f32 %v1857, 0.0
        %v1950 = vmax.f32 %v1859, 0.0
        %v1951 = vmax.f32 %v1861, 0.0
        %v1952 = vmax.f32 %v1863, 0.0
        %v1953 = vmax.f32 %v1867, 0.0
        %v1954 = vmax.f32 %v1869, 0.0
        %v1955 = vmax.f32 %v1871, 0.0
        %v1956 = vmax.f32 %v1873, 0.0
        %v1957 = vmax.f32 %v1877, 0.0
        %v1958 = vmax.f32 %v1879, 0.0
        %v1959 = vmax.f32 %v1881, 0.0
        %v1960 = vmax.f32 %v1883, 0.0
        %v1961 = vmax.f32 %v1887, 0.0
        %v1962 = vmax.f32 %v1889, 0.0
        %v1963 = vmax.f32 %v1891, 0.0
        %v1964 = vmax.f32 %v1893, 0.0
        %v1965 = vmax.f32 %v1897, 0.0
        %v1966 = vmax.f32 %v1899, 0.0
        %v1967 = vmax.f32 %v1901, 0.0
        %v1968 = vmax.f32 %v1903, 0.0
        %v1969 = vpack.c.bf16 %v1907, %v1905
        %v1970 = vpack.c.bf16 %v1908, %v1906
        %v1971 = vpack.c.bf16 %v1911, %v1909
        %v1972 = vpack.c.bf16 %v1912, %v1910
        %v1973 = vpack.c.bf16 %v1915, %v1913
        %v1974 = vpack.c.bf16 %v1916, %v1914
        %v1975 = vpack.c.bf16 %v1919, %v1917
        %v1976 = vpack.c.bf16 %v1920, %v1918
        %v1977 = vpack.c.bf16 %v1923, %v1921
        %v1978 = vpack.c.bf16 %v1924, %v1922
        %v1979 = vpack.c.bf16 %v1927, %v1925
        %v1980 = vpack.c.bf16 %v1928, %v1926
        %v1981 = vpack.c.bf16 %v1931, %v1929
        %v1982 = vpack.c.bf16 %v1932, %v1930
        %v1983 = vpack.c.bf16 %v1935, %v1933
        %v1984 = vpack.c.bf16 %v1936, %v1934
        %v1985 = vpack.c.bf16 %v1939, %v1937
        %v1986 = vpack.c.bf16 %v1940, %v1938
        %v1987 = vpack.c.bf16 %v1943, %v1941
        %v1988 = vpack.c.bf16 %v1944, %v1942
        %v1989 = vpack.c.bf16 %v1947, %v1945
        %v1990 = vpack.c.bf16 %v1948, %v1946
        %v1991 = vpack.c.bf16 %v1951, %v1949
        %v1992 = vpack.c.bf16 %v1952, %v1950
        %v1993 = vpack.c.bf16 %v1955, %v1953
        %v1994 = vpack.c.bf16 %v1956, %v1954
        %v1995 = vpack.c.bf16 %v1959, %v1957
        %v1996 = vpack.c.bf16 %v1960, %v1958
        %v1997 = vpack.c.bf16 %v1963, %v1961
        %v1998 = vpack.c.bf16 %v1964, %v1962
        %v1999 = vpack.c.bf16 %v1967, %v1965
        %v2000 = vpack.c.bf16 %v1968, %v1966
        %s2001 = scalar_lea.vmem %s4, 256
        %v2002 = vld [vmem:[%s2001] sm:$0xff]
        %v2003 = vld [vmem:[%s2001 + $0x8] sm:$0xff]
        %v2004 = vld [vmem:[%s2001 + $0x10] sm:$0xff]
        %v2005 = vld [vmem:[%s2001 + $0x18] sm:$0xff]
        %v2006 = vld [vmem:[%s2001 + $0x20] sm:$0xff]
        %v2007 = vld [vmem:[%s2001 + $0x28] sm:$0xff]
        %v2008 = vld [vmem:[%s2001 + $0x30] sm:$0xff]
        %v2009 = vld [vmem:[%s2001 + $0x38] sm:$0xff]
        %v2010 = vld [vmem:[%s2001 + $0x40] sm:$0xff]
        %v2011 = vld [vmem:[%s2001 + $0x48] sm:$0xff]
        %v2012 = vld [vmem:[%s2001 + $0x50] sm:$0xff]
        %v2013 = vld [vmem:[%s2001 + $0x58] sm:$0xff]
        %v2014 = vld [vmem:[%s2001 + $0x60] sm:$0xff]
        %v2015 = vld [vmem:[%s2001 + $0x68] sm:$0xff]
        %v2016 = vld [vmem:[%s2001 + $0x70] sm:$0xff]
        %v2017 = vld [vmem:[%s2001 + $0x78] sm:$0xff]
        %v2018 = vld [vmem:[%s2001 + $0x80] sm:$0xff]
        %v2019 = vld [vmem:[%s2001 + $0x88] sm:$0xff]
        %v2020 = vld [vmem:[%s2001 + $0x90] sm:$0xff]
        %v2021 = vld [vmem:[%s2001 + $0x98] sm:$0xff]
        %v2022 = vld [vmem:[%s2001 + $0xa0] sm:$0xff]
        %v2023 = vld [vmem:[%s2001 + $0xa8] sm:$0xff]
        %v2024 = vld [vmem:[%s2001 + $0xb0] sm:$0xff]
        %v2025 = vld [vmem:[%s2001 + $0xb8] sm:$0xff]
        %v2026 = vld [vmem:[%s2001 + $0xc0] sm:$0xff]
        %v2027 = vld [vmem:[%s2001 + $0xc8] sm:$0xff]
        %v2028 = vld [vmem:[%s2001 + $0xd0] sm:$0xff]
        %v2029 = vld [vmem:[%s2001 + $0xd8] sm:$0xff]
        %v2030 = vld [vmem:[%s2001 + $0xe0] sm:$0xff]
        %v2031 = vld [vmem:[%s2001 + $0xe8] sm:$0xff]
        %v2032 = vld [vmem:[%s2001 + $0xf0] sm:$0xff]
        %v2033 = vld [vmem:[%s2001 + $0xf8] sm:$0xff]
        %s2034 = scalar_lea.vmem %s5, 2
        %v2035 = vld [vmem:[%s2034] sm:$0x3]
        %v2037 = vlaneseq
        %v2038 = vshrl.u32 %v2037, 7
        %v2039 = vsub.s32 0, %v2038
        %v2040 = vrot.slane %v2035, %v2039
        %v2041 = vlaneseq
        %v2042 = vshrl.u32 %v2041, 7
        %v2043 = vsub.s32 1, %v2042
        %v2044 = vrot.slane %v2035, %v2043
        %v2079 = vunpack.c.l.b16 %v2002
        %v2080 = vunpack.c.h.b16 %v2002
        %v2081 = vunpack.c.l.b16 %v2003
        %v2082 = vunpack.c.h.b16 %v2003
        %v2083 = vunpack.c.l.b16 %v2004
        %v2084 = vunpack.c.h.b16 %v2004
        %v2085 = vunpack.c.l.b16 %v2005
        %v2086 = vunpack.c.h.b16 %v2005
        %v2087 = vunpack.c.l.b16 %v2006
        %v2088 = vunpack.c.h.b16 %v2006
        %v2089 = vunpack.c.l.b16 %v2007
        %v2090 = vunpack.c.h.b16 %v2007
        %v2091 = vunpack.c.l.b16 %v2008
        %v2092 = vunpack.c.h.b16 %v2008
        %v2093 = vunpack.c.l.b16 %v2009
        %v2094 = vunpack.c.h.b16 %v2009
        %v2095 = vunpack.c.l.b16 %v2010
        %v2096 = vunpack.c.h.b16 %v2010
        %v2097 = vunpack.c.l.b16 %v2011
        %v2098 = vunpack.c.h.b16 %v2011
        %v2099 = vunpack.c.l.b16 %v2012
        %v2100 = vunpack.c.h.b16 %v2012
        %v2101 = vunpack.c.l.b16 %v2013
        %v2102 = vunpack.c.h.b16 %v2013
        %v2103 = vunpack.c.l.b16 %v2014
        %v2104 = vunpack.c.h.b16 %v2014
        %v2105 = vunpack.c.l.b16 %v2015
        %v2106 = vunpack.c.h.b16 %v2015
        %v2107 = vunpack.c.l.b16 %v2016
        %v2108 = vunpack.c.h.b16 %v2016
        %v2109 = vunpack.c.l.b16 %v2017
        %v2110 = vunpack.c.h.b16 %v2017
        %v2111 = vunpack.c.l.b16 %v2018
        %v2112 = vunpack.c.h.b16 %v2018
        %v2113 = vunpack.c.l.b16 %v2019
        %v2114 = vunpack.c.h.b16 %v2019
        %v2115 = vunpack.c.l.b16 %v2020
        %v2116 = vunpack.c.h.b16 %v2020
        %v2117 = vunpack.c.l.b16 %v2021
        %v2118 = vunpack.c.h.b16 %v2021
        %v2119 = vunpack.c.l.b16 %v2022
        %v2120 = vunpack.c.h.b16 %v2022
        %v2121 = vunpack.c.l.b16 %v2023
        %v2122 = vunpack.c.h.b16 %v2023
        %v2123 = vunpack.c.l.b16 %v2024
        %v2124 = vunpack.c.h.b16 %v2024
        %v2125 = vunpack.c.l.b16 %v2025
        %v2126 = vunpack.c.h.b16 %v2025
        %v2127 = vunpack.c.l.b16 %v2026
        %v2128 = vunpack.c.h.b16 %v2026
        %v2129 = vunpack.c.l.b16 %v2027
        %v2130 = vunpack.c.h.b16 %v2027
        %v2131 = vunpack.c.l.b16 %v2028
        %v2132 = vunpack.c.h.b16 %v2028
        %v2133 = vunpack.c.l.b16 %v2029
        %v2134 = vunpack.c.h.b16 %v2029
        %v2135 = vunpack.c.l.b16 %v2030
        %v2136 = vunpack.c.h.b16 %v2030
        %v2137 = vunpack.c.l.b16 %v2031
        %v2138 = vunpack.c.h.b16 %v2031
        %v2139 = vunpack.c.l.b16 %v2032
        %v2140 = vunpack.c.h.b16 %v2032
        %v2141 = vunpack.c.l.b16 %v2033
        %v2142 = vunpack.c.h.b16 %v2033
        %v2143 = vpack.c.b16 %v2081, %v2079
        %v2144 = vpack.c.b16 %v2082, %v2080
        %v2145 = vpack.c.b16 %v2085, %v2083
        %v2146 = vpack.c.b16 %v2086, %v2084
        %v2147 = vpack.c.b16 %v2089, %v2087
        %v2148 = vpack.c.b16 %v2090, %v2088
        %v2149 = vpack.c.b16 %v2093, %v2091
        %v2150 = vpack.c.b16 %v2094, %v2092
        %v2151 = vpack.c.b16 %v2097, %v2095
        %v2152 = vpack.c.b16 %v2098, %v2096
        %v2153 = vpack.c.b16 %v2101, %v2099
        %v2154 = vpack.c.b16 %v2102, %v2100
        %v2155 = vpack.c.b16 %v2105, %v2103
        %v2156 = vpack.c.b16 %v2106, %v2104
        %v2157 = vpack.c.b16 %v2109, %v2107
        %v2158 = vpack.c.b16 %v2110, %v2108
        %v2159 = vpack.c.b16 %v2113, %v2111
        %v2160 = vpack.c.b16 %v2114, %v2112
        %v2161 = vpack.c.b16 %v2117, %v2115
        %v2162 = vpack.c.b16 %v2118, %v2116
        %v2163 = vpack.c.b16 %v2121, %v2119
        %v2164 = vpack.c.b16 %v2122, %v2120
        %v2165 = vpack.c.b16 %v2125, %v2123
        %v2166 = vpack.c.b16 %v2126, %v2124
        %v2167 = vpack.c.b16 %v2129, %v2127
        %v2168 = vpack.c.b16 %v2130, %v2128
        %v2169 = vpack.c.b16 %v2133, %v2131
        %v2170 = vpack.c.b16 %v2134, %v2132
        %v2171 = vpack.c.b16 %v2137, %v2135
        %v2172 = vpack.c.b16 %v2138, %v2136
        %v2173 = vpack.c.b16 %v2141, %v2139
        %v2174 = vpack.c.b16 %v2142, %v2140
        %2207 = vmatprep.subr.bf16.mxu0 %v2158
        %2208 = vmatpush1.bf16.msra.mxu0 %v2157
        %2209 = vmatprep.subr.bf16.mxu0 %v2156
        %2210 = vmatpush1.bf16.msra.mxu0 %v2155
        %2211 = vmatprep.subr.bf16.mxu0 %v2154
        %2212 = vmatpush1.bf16.msra.mxu0 %v2153
        %2213 = vmatprep.subr.bf16.mxu0 %v2152
        %2214 = vmatpush1.bf16.msra.mxu0 %v2151
        %2215 = vmatprep.subr.bf16.mxu0 %v2150
        %2216 = vmatpush1.bf16.msra.mxu0 %v2149
        %2217 = vmatprep.subr.bf16.mxu0 %v2148
        %2218 = vmatpush1.bf16.msra.mxu0 %v2147
        %2219 = vmatprep.subr.bf16.mxu0 %v2146
        %2220 = vmatpush1.bf16.msra.mxu0 %v2145
        %2221 = vmatprep.subr.bf16.mxu0 %v2144
        %2222 = vmatpush1.bf16.msra.mxu0 %v2143
        %2223 = vmatprep.subr.bf16.mxu0 %v2174
        %2224 = vmatpush2.bf16.msra.mxu0 %v2173
        %2225 = vmatprep.subr.bf16.mxu0 %v2172
        %2226 = vmatpush2.bf16.msra.mxu0 %v2171
        %2227 = vmatprep.subr.bf16.mxu0 %v2170
        %2228 = vmatpush2.bf16.msra.mxu0 %v2169
        %2229 = vmatprep.subr.bf16.mxu0 %v2168
        %2230 = vmatpush2.bf16.msra.mxu0 %v2167
        %2231 = vmatprep.subr.bf16.mxu0 %v2166
        %2232 = vmatpush2.bf16.msra.mxu0 %v2165
        %2233 = vmatprep.subr.bf16.mxu0 %v2164
        %2234 = vmatpush2.bf16.msra.mxu0 %v2163
        %2235 = vmatprep.subr.bf16.mxu0 %v2162
        %2236 = vmatpush2.bf16.msra.mxu0 %v2161
        %2237 = vmatprep.subr.bf16.mxu0 %v2160
        %2238 = vmatpush2.bf16.msra.mxu0 %v2159
        %2239 = vmatprep.mubr.bf16.mxu0 %v1970
        %2240 = vmatmul.mubr.bf16.gmra.mxu0 %v1969
        %v2241 = vpop.f32.mrf.mxu0
        %v2242 = vadd.f32 %v2040, %v2241
        %v2243 = vpop.f32.mrf.mxu0
        %v2244 = vadd.f32 %v2044, %v2243
        %v2245 = vpop.f32.mrf.mxu0
        %v2246 = vadd.f32 %v2040, %v2245
        %v2247 = vpop.f32.mrf.mxu0
        %v2248 = vadd.f32 %v2044, %v2247
        %2249 = vmatprep.mubr.bf16.mxu0 %v1972
        %2250 = vmatmul.mubr.bf16.gmra.mxu0 %v1971
        %v2251 = vpop.f32.mrf.mxu0
        %v2252 = vadd.f32 %v2040, %v2251
        %v2253 = vpop.f32.mrf.mxu0
        %v2254 = vadd.f32 %v2044, %v2253
        %v2255 = vpop.f32.mrf.mxu0
        %v2256 = vadd.f32 %v2040, %v2255
        %v2257 = vpop.f32.mrf.mxu0
        %v2258 = vadd.f32 %v2044, %v2257
        %2259 = vmatprep.mubr.bf16.mxu0 %v1974
        %2260 = vmatmul.mubr.bf16.gmra.mxu0 %v1973
        %v2261 = vpop.f32.mrf.mxu0
        %v2262 = vadd.f32 %v2040, %v2261
        %v2263 = vpop.f32.mrf.mxu0
        %v2264 = vadd.f32 %v2044, %v2263
        %v2265 = vpop.f32.mrf.mxu0
        %v2266 = vadd.f32 %v2040, %v2265
        %v2267 = vpop.f32.mrf.mxu0
        %v2268 = vadd.f32 %v2044, %v2267
        %2269 = vmatprep.mubr.bf16.mxu0 %v1976
        %2270 = vmatmul.mubr.bf16.gmra.mxu0 %v1975
        %v2271 = vpop.f32.mrf.mxu0
        %v2272 = vadd.f32 %v2040, %v2271
        %v2273 = vpop.f32.mrf.mxu0
        %v2274 = vadd.f32 %v2044, %v2273
        %v2275 = vpop.f32.mrf.mxu0
        %v2276 = vadd.f32 %v2040, %v2275
        %v2277 = vpop.f32.mrf.mxu0
        %v2278 = vadd.f32 %v2044, %v2277
        %2279 = vmatprep.mubr.bf16.mxu0 %v1978
        %2280 = vmatmul.mubr.bf16.gmra.mxu0 %v1977
        %v2281 = vpop.f32.mrf.mxu0
        %v2282 = vadd.f32 %v2040, %v2281
        %v2283 = vpop.f32.mrf.mxu0
        %v2284 = vadd.f32 %v2044, %v2283
        %v2285 = vpop.f32.mrf.mxu0
        %v2286 = vadd.f32 %v2040, %v2285
        %v2287 = vpop.f32.mrf.mxu0
        %v2288 = vadd.f32 %v2044, %v2287
        %2289 = vmatprep.mubr.bf16.mxu0 %v1980
        %2290 = vmatmul.mubr.bf16.gmra.mxu0 %v1979
        %v2291 = vpop.f32.mrf.mxu0
        %v2292 = vadd.f32 %v2040, %v2291
        %v2293 = vpop.f32.mrf.mxu0
        %v2294 = vadd.f32 %v2044, %v2293
        %v2295 = vpop.f32.mrf.mxu0
        %v2296 = vadd.f32 %v2040, %v2295
        %v2297 = vpop.f32.mrf.mxu0
        %v2298 = vadd.f32 %v2044, %v2297
        %2299 = vmatprep.mubr.bf16.mxu0 %v1982
        %2300 = vmatmul.mubr.bf16.gmra.mxu0 %v1981
        %v2301 = vpop.f32.mrf.mxu0
        %v2302 = vadd.f32 %v2040, %v2301
        %v2303 = vpop.f32.mrf.mxu0
        %v2304 = vadd.f32 %v2044, %v2303
        %v2305 = vpop.f32.mrf.mxu0
        %v2306 = vadd.f32 %v2040, %v2305
        %v2307 = vpop.f32.mrf.mxu0
        %v2308 = vadd.f32 %v2044, %v2307
        %2309 = vmatprep.mubr.bf16.mxu0 %v1984
        %2310 = vmatmul.mubr.bf16.gmra.mxu0 %v1983
        %v2311 = vpop.f32.mrf.mxu0
        %v2312 = vadd.f32 %v2040, %v2311
        %v2313 = vpop.f32.mrf.mxu0
        %v2314 = vadd.f32 %v2044, %v2313
        %v2315 = vpop.f32.mrf.mxu0
        %v2316 = vadd.f32 %v2040, %v2315
        %v2317 = vpop.f32.mrf.mxu0
        %v2318 = vadd.f32 %v2044, %v2317
        %2319 = vmatprep.mubr.bf16.mxu0 %v1986
        %2320 = vmatmul.mubr.bf16.gmra.mxu0 %v1985
        %v2321 = vpop.f32.mrf.mxu0
        %v2322 = vadd.f32 %v2040, %v2321
        %v2323 = vpop.f32.mrf.mxu0
        %v2324 = vadd.f32 %v2044, %v2323
        %v2325 = vpop.f32.mrf.mxu0
        %v2326 = vadd.f32 %v2040, %v2325
        %v2327 = vpop.f32.mrf.mxu0
        %v2328 = vadd.f32 %v2044, %v2327
        %2329 = vmatprep.mubr.bf16.mxu0 %v1988
        %2330 = vmatmul.mubr.bf16.gmra.mxu0 %v1987
        %v2331 = vpop.f32.mrf.mxu0
        %v2332 = vadd.f32 %v2040, %v2331
        %v2333 = vpop.f32.mrf.mxu0
        %v2334 = vadd.f32 %v2044, %v2333
        %v2335 = vpop.f32.mrf.mxu0
        %v2336 = vadd.f32 %v2040, %v2335
        %v2337 = vpop.f32.mrf.mxu0
        %v2338 = vadd.f32 %v2044, %v2337
        %2339 = vmatprep.mubr.bf16.mxu0 %v1990
        %2340 = vmatmul.mubr.bf16.gmra.mxu0 %v1989
        %v2341 = vpop.f32.mrf.mxu0
        %v2342 = vadd.f32 %v2040, %v2341
        %v2343 = vpop.f32.mrf.mxu0
        %v2344 = vadd.f32 %v2044, %v2343
        %v2345 = vpop.f32.mrf.mxu0
        %v2346 = vadd.f32 %v2040, %v2345
        %v2347 = vpop.f32.mrf.mxu0
        %v2348 = vadd.f32 %v2044, %v2347
        %2349 = vmatprep.mubr.bf16.mxu0 %v1992
        %2350 = vmatmul.mubr.bf16.gmra.mxu0 %v1991
        %v2351 = vpop.f32.mrf.mxu0
        %v2352 = vadd.f32 %v2040, %v2351
        %v2353 = vpop.f32.mrf.mxu0
        %v2354 = vadd.f32 %v2044, %v2353
        %v2355 = vpop.f32.mrf.mxu0
        %v2356 = vadd.f32 %v2040, %v2355
        %v2357 = vpop.f32.mrf.mxu0
        %v2358 = vadd.f32 %v2044, %v2357
        %2359 = vmatprep.mubr.bf16.mxu0 %v1994
        %2360 = vmatmul.mubr.bf16.gmra.mxu0 %v1993
        %v2361 = vpop.f32.mrf.mxu0
        %v2362 = vadd.f32 %v2040, %v2361
        %v2363 = vpop.f32.mrf.mxu0
        %v2364 = vadd.f32 %v2044, %v2363
        %v2365 = vpop.f32.mrf.mxu0
        %v2366 = vadd.f32 %v2040, %v2365
        %v2367 = vpop.f32.mrf.mxu0
        %v2368 = vadd.f32 %v2044, %v2367
        %2369 = vmatprep.mubr.bf16.mxu0 %v1996
        %2370 = vmatmul.mubr.bf16.gmra.mxu0 %v1995
        %v2371 = vpop.f32.mrf.mxu0
        %v2372 = vadd.f32 %v2040, %v2371
        %v2373 = vpop.f32.mrf.mxu0
        %v2374 = vadd.f32 %v2044, %v2373
        %v2375 = vpop.f32.mrf.mxu0
        %v2376 = vadd.f32 %v2040, %v2375
        %v2377 = vpop.f32.mrf.mxu0
        %v2378 = vadd.f32 %v2044, %v2377
        %2379 = vmatprep.mubr.bf16.mxu0 %v1998
        %2380 = vmatmul.mubr.bf16.gmra.mxu0 %v1997
        %v2381 = vpop.f32.mrf.mxu0
        %v2382 = vadd.f32 %v2040, %v2381
        %v2383 = vpop.f32.mrf.mxu0
        %v2384 = vadd.f32 %v2044, %v2383
        %v2385 = vpop.f32.mrf.mxu0
        %v2386 = vadd.f32 %v2040, %v2385
        %v2387 = vpop.f32.mrf.mxu0
        %v2388 = vadd.f32 %v2044, %v2387
        %2389 = vmatprep.mubr.bf16.mxu0 %v2000
        %2390 = vmatmul.mubr.bf16.gmra.mxu0 %v1999
        %v2391 = vpop.f32.mrf.mxu0
        %v2392 = vadd.f32 %v2040, %v2391
        %v2393 = vpop.f32.mrf.mxu0
        %v2394 = vadd.f32 %v2044, %v2393
        %v2395 = vpop.f32.mrf.mxu0
        %v2396 = vadd.f32 %v2040, %v2395
        %v2397 = vpop.f32.mrf.mxu0
        %v2398 = vadd.f32 %v2044, %v2397
        %2399 = vdwg.mxu0
        %v2400 = vmax.f32 %v2242, 0.0
        %v2401 = vmax.f32 %v2244, 0.0
        %v2402 = vmax.f32 %v2246, 0.0
        %v2403 = vmax.f32 %v2248, 0.0
        %v2404 = vmax.f32 %v2252, 0.0
        %v2405 = vmax.f32 %v2254, 0.0
        %v2406 = vmax.f32 %v2256, 0.0
        %v2407 = vmax.f32 %v2258, 0.0
        %v2408 = vmax.f32 %v2262, 0.0
        %v2409 = vmax.f32 %v2264, 0.0
        %v2410 = vmax.f32 %v2266, 0.0
        %v2411 = vmax.f32 %v2268, 0.0
        %v2412 = vmax.f32 %v2272, 0.0
        %v2413 = vmax.f32 %v2274, 0.0
        %v2414 = vmax.f32 %v2276, 0.0
        %v2415 = vmax.f32 %v2278, 0.0
        %v2416 = vmax.f32 %v2282, 0.0
        %v2417 = vmax.f32 %v2284, 0.0
        %v2418 = vmax.f32 %v2286, 0.0
        %v2419 = vmax.f32 %v2288, 0.0
        %v2420 = vmax.f32 %v2292, 0.0
        %v2421 = vmax.f32 %v2294, 0.0
        %v2422 = vmax.f32 %v2296, 0.0
        %v2423 = vmax.f32 %v2298, 0.0
        %v2424 = vmax.f32 %v2302, 0.0
        %v2425 = vmax.f32 %v2304, 0.0
        %v2426 = vmax.f32 %v2306, 0.0
        %v2427 = vmax.f32 %v2308, 0.0
        %v2428 = vmax.f32 %v2312, 0.0
        %v2429 = vmax.f32 %v2314, 0.0
        %v2430 = vmax.f32 %v2316, 0.0
        %v2431 = vmax.f32 %v2318, 0.0
        %v2432 = vmax.f32 %v2322, 0.0
        %v2433 = vmax.f32 %v2324, 0.0
        %v2434 = vmax.f32 %v2326, 0.0
        %v2435 = vmax.f32 %v2328, 0.0
        %v2436 = vmax.f32 %v2332, 0.0
        %v2437 = vmax.f32 %v2334, 0.0
        %v2438 = vmax.f32 %v2336, 0.0
        %v2439 = vmax.f32 %v2338, 0.0
        %v2440 = vmax.f32 %v2342, 0.0
        %v2441 = vmax.f32 %v2344, 0.0
        %v2442 = vmax.f32 %v2346, 0.0
        %v2443 = vmax.f32 %v2348, 0.0
        %v2444 = vmax.f32 %v2352, 0.0
        %v2445 = vmax.f32 %v2354, 0.0
        %v2446 = vmax.f32 %v2356, 0.0
        %v2447 = vmax.f32 %v2358, 0.0
        %v2448 = vmax.f32 %v2362, 0.0
        %v2449 = vmax.f32 %v2364, 0.0
        %v2450 = vmax.f32 %v2366, 0.0
        %v2451 = vmax.f32 %v2368, 0.0
        %v2452 = vmax.f32 %v2372, 0.0
        %v2453 = vmax.f32 %v2374, 0.0
        %v2454 = vmax.f32 %v2376, 0.0
        %v2455 = vmax.f32 %v2378, 0.0
        %v2456 = vmax.f32 %v2382, 0.0
        %v2457 = vmax.f32 %v2384, 0.0
        %v2458 = vmax.f32 %v2386, 0.0
        %v2459 = vmax.f32 %v2388, 0.0
        %v2460 = vmax.f32 %v2392, 0.0
        %v2461 = vmax.f32 %v2394, 0.0
        %v2462 = vmax.f32 %v2396, 0.0
        %v2463 = vmax.f32 %v2398, 0.0
        %v2464 = vpack.c.bf16 %v2402, %v2400
        %v2465 = vpack.c.bf16 %v2403, %v2401
        %v2466 = vpack.c.bf16 %v2406, %v2404
        %v2467 = vpack.c.bf16 %v2407, %v2405
        %v2468 = vpack.c.bf16 %v2410, %v2408
        %v2469 = vpack.c.bf16 %v2411, %v2409
        %v2470 = vpack.c.bf16 %v2414, %v2412
        %v2471 = vpack.c.bf16 %v2415, %v2413
        %v2472 = vpack.c.bf16 %v2418, %v2416
        %v2473 = vpack.c.bf16 %v2419, %v2417
        %v2474 = vpack.c.bf16 %v2422, %v2420
        %v2475 = vpack.c.bf16 %v2423, %v2421
        %v2476 = vpack.c.bf16 %v2426, %v2424
        %v2477 = vpack.c.bf16 %v2427, %v2425
        %v2478 = vpack.c.bf16 %v2430, %v2428
        %v2479 = vpack.c.bf16 %v2431, %v2429
        %v2480 = vpack.c.bf16 %v2434, %v2432
        %v2481 = vpack.c.bf16 %v2435, %v2433
        %v2482 = vpack.c.bf16 %v2438, %v2436
        %v2483 = vpack.c.bf16 %v2439, %v2437
        %v2484 = vpack.c.bf16 %v2442, %v2440
        %v2485 = vpack.c.bf16 %v2443, %v2441
        %v2486 = vpack.c.bf16 %v2446, %v2444
        %v2487 = vpack.c.bf16 %v2447, %v2445
        %v2488 = vpack.c.bf16 %v2450, %v2448
        %v2489 = vpack.c.bf16 %v2451, %v2449
        %v2490 = vpack.c.bf16 %v2454, %v2452
        %v2491 = vpack.c.bf16 %v2455, %v2453
        %v2492 = vpack.c.bf16 %v2458, %v2456
        %v2493 = vpack.c.bf16 %v2459, %v2457
        %v2494 = vpack.c.bf16 %v2462, %v2460
        %v2495 = vpack.c.bf16 %v2463, %v2461
        %s2496 = scalar_lea.vmem %s4, 512
        %v2497 = vld [vmem:[%s2496] sm:$0xff]
        %v2498 = vld [vmem:[%s2496 + $0x8] sm:$0xff]
        %v2499 = vld [vmem:[%s2496 + $0x10] sm:$0xff]
        %v2500 = vld [vmem:[%s2496 + $0x18] sm:$0xff]
        %v2501 = vld [vmem:[%s2496 + $0x20] sm:$0xff]
        %v2502 = vld [vmem:[%s2496 + $0x28] sm:$0xff]
        %v2503 = vld [vmem:[%s2496 + $0x30] sm:$0xff]
        %v2504 = vld [vmem:[%s2496 + $0x38] sm:$0xff]
        %v2505 = vld [vmem:[%s2496 + $0x40] sm:$0xff]
        %v2506 = vld [vmem:[%s2496 + $0x48] sm:$0xff]
        %v2507 = vld [vmem:[%s2496 + $0x50] sm:$0xff]
        %v2508 = vld [vmem:[%s2496 + $0x58] sm:$0xff]
        %v2509 = vld [vmem:[%s2496 + $0x60] sm:$0xff]
        %v2510 = vld [vmem:[%s2496 + $0x68] sm:$0xff]
        %v2511 = vld [vmem:[%s2496 + $0x70] sm:$0xff]
        %v2512 = vld [vmem:[%s2496 + $0x78] sm:$0xff]
        %v2513 = vld [vmem:[%s2496 + $0x80] sm:$0xff]
        %v2514 = vld [vmem:[%s2496 + $0x88] sm:$0xff]
        %v2515 = vld [vmem:[%s2496 + $0x90] sm:$0xff]
        %v2516 = vld [vmem:[%s2496 + $0x98] sm:$0xff]
        %v2517 = vld [vmem:[%s2496 + $0xa0] sm:$0xff]
        %v2518 = vld [vmem:[%s2496 + $0xa8] sm:$0xff]
        %v2519 = vld [vmem:[%s2496 + $0xb0] sm:$0xff]
        %v2520 = vld [vmem:[%s2496 + $0xb8] sm:$0xff]
        %v2521 = vld [vmem:[%s2496 + $0xc0] sm:$0xff]
        %v2522 = vld [vmem:[%s2496 + $0xc8] sm:$0xff]
        %v2523 = vld [vmem:[%s2496 + $0xd0] sm:$0xff]
        %v2524 = vld [vmem:[%s2496 + $0xd8] sm:$0xff]
        %v2525 = vld [vmem:[%s2496 + $0xe0] sm:$0xff]
        %v2526 = vld [vmem:[%s2496 + $0xe8] sm:$0xff]
        %v2527 = vld [vmem:[%s2496 + $0xf0] sm:$0xff]
        %v2528 = vld [vmem:[%s2496 + $0xf8] sm:$0xff]
        %s2529 = scalar_lea.vmem %s5, 4
        %v2530 = vld [vmem:[%s2529] sm:$0x3]
        %v2532 = vlaneseq
        %v2533 = vshrl.u32 %v2532, 7
        %v2534 = vsub.s32 0, %v2533
        %v2535 = vrot.slane %v2530, %v2534
        %v2536 = vlaneseq
        %v2537 = vshrl.u32 %v2536, 7
        %v2538 = vsub.s32 1, %v2537
        %v2539 = vrot.slane %v2530, %v2538
        %v2574 = vunpack.c.l.b16 %v2497
        %v2575 = vunpack.c.h.b16 %v2497
        %v2576 = vunpack.c.l.b16 %v2498
        %v2577 = vunpack.c.h.b16 %v2498
        %v2578 = vunpack.c.l.b16 %v2499
        %v2579 = vunpack.c.h.b16 %v2499
        %v2580 = vunpack.c.l.b16 %v2500
        %v2581 = vunpack.c.h.b16 %v2500
        %v2582 = vunpack.c.l.b16 %v2501
        %v2583 = vunpack.c.h.b16 %v2501
        %v2584 = vunpack.c.l.b16 %v2502
        %v2585 = vunpack.c.h.b16 %v2502
        %v2586 = vunpack.c.l.b16 %v2503
        %v2587 = vunpack.c.h.b16 %v2503
        %v2588 = vunpack.c.l.b16 %v2504
        %v2589 = vunpack.c.h.b16 %v2504
        %v2590 = vunpack.c.l.b16 %v2505
        %v2591 = vunpack.c.h.b16 %v2505
        %v2592 = vunpack.c.l.b16 %v2506
        %v2593 = vunpack.c.h.b16 %v2506
        %v2594 = vunpack.c.l.b16 %v2507
        %v2595 = vunpack.c.h.b16 %v2507
        %v2596 = vunpack.c.l.b16 %v2508
        %v2597 = vunpack.c.h.b16 %v2508
        %v2598 = vunpack.c.l.b16 %v2509
        %v2599 = vunpack.c.h.b16 %v2509
        %v2600 = vunpack.c.l.b16 %v2510
        %v2601 = vunpack.c.h.b16 %v2510
        %v2602 = vunpack.c.l.b16 %v2511
        %v2603 = vunpack.c.h.b16 %v2511
        %v2604 = vunpack.c.l.b16 %v2512
        %v2605 = vunpack.c.h.b16 %v2512
        %v2606 = vunpack.c.l.b16 %v2513
        %v2607 = vunpack.c.h.b16 %v2513
        %v2608 = vunpack.c.l.b16 %v2514
        %v2609 = vunpack.c.h.b16 %v2514
        %v2610 = vunpack.c.l.b16 %v2515
        %v2611 = vunpack.c.h.b16 %v2515
        %v2612 = vunpack.c.l.b16 %v2516
        %v2613 = vunpack.c.h.b16 %v2516
        %v2614 = vunpack.c.l.b16 %v2517
        %v2615 = vunpack.c.h.b16 %v2517
        %v2616 = vunpack.c.l.b16 %v2518
        %v2617 = vunpack.c.h.b16 %v2518
        %v2618 = vunpack.c.l.b16 %v2519
        %v2619 = vunpack.c.h.b16 %v2519
        %v2620 = vunpack.c.l.b16 %v2520
        %v2621 = vunpack.c.h.b16 %v2520
        %v2622 = vunpack.c.l.b16 %v2521
        %v2623 = vunpack.c.h.b16 %v2521
        %v2624 = vunpack.c.l.b16 %v2522
        %v2625 = vunpack.c.h.b16 %v2522
        %v2626 = vunpack.c.l.b16 %v2523
        %v2627 = vunpack.c.h.b16 %v2523
        %v2628 = vunpack.c.l.b16 %v2524
        %v2629 = vunpack.c.h.b16 %v2524
        %v2630 = vunpack.c.l.b16 %v2525
        %v2631 = vunpack.c.h.b16 %v2525
        %v2632 = vunpack.c.l.b16 %v2526
        %v2633 = vunpack.c.h.b16 %v2526
        %v2634 = vunpack.c.l.b16 %v2527
        %v2635 = vunpack.c.h.b16 %v2527
        %v2636 = vunpack.c.l.b16 %v2528
        %v2637 = vunpack.c.h.b16 %v2528
        %v2638 = vpack.c.b16 %v2576, %v2574
        %v2639 = vpack.c.b16 %v2577, %v2575
        %v2640 = vpack.c.b16 %v2580, %v2578
        %v2641 = vpack.c.b16 %v2581, %v2579
        %v2642 = vpack.c.b16 %v2584, %v2582
        %v2643 = vpack.c.b16 %v2585, %v2583
        %v2644 = vpack.c.b16 %v2588, %v2586
        %v2645 = vpack.c.b16 %v2589, %v2587
        %v2646 = vpack.c.b16 %v2592, %v2590
        %v2647 = vpack.c.b16 %v2593, %v2591
        %v2648 = vpack.c.b16 %v2596, %v2594
        %v2649 = vpack.c.b16 %v2597, %v2595
        %v2650 = vpack.c.b16 %v2600, %v2598
        %v2651 = vpack.c.b16 %v2601, %v2599
        %v2652 = vpack.c.b16 %v2604, %v2602
        %v2653 = vpack.c.b16 %v2605, %v2603
        %v2654 = vpack.c.b16 %v2608, %v2606
        %v2655 = vpack.c.b16 %v2609, %v2607
        %v2656 = vpack.c.b16 %v2612, %v2610
        %v2657 = vpack.c.b16 %v2613, %v2611
        %v2658 = vpack.c.b16 %v2616, %v2614
        %v2659 = vpack.c.b16 %v2617, %v2615
        %v2660 = vpack.c.b16 %v2620, %v2618
        %v2661 = vpack.c.b16 %v2621, %v2619
        %v2662 = vpack.c.b16 %v2624, %v2622
        %v2663 = vpack.c.b16 %v2625, %v2623
        %v2664 = vpack.c.b16 %v2628, %v2626
        %v2665 = vpack.c.b16 %v2629, %v2627
        %v2666 = vpack.c.b16 %v2632, %v2630
        %v2667 = vpack.c.b16 %v2633, %v2631
        %v2668 = vpack.c.b16 %v2636, %v2634
        %v2669 = vpack.c.b16 %v2637, %v2635
        %2702 = vmatprep.subr.bf16.mxu0 %v2653
        %2703 = vmatpush1.bf16.msra.mxu0 %v2652
        %2704 = vmatprep.subr.bf16.mxu0 %v2651
        %2705 = vmatpush1.bf16.msra.mxu0 %v2650
        %2706 = vmatprep.subr.bf16.mxu0 %v2649
        %2707 = vmatpush1.bf16.msra.mxu0 %v2648
        %2708 = vmatprep.subr.bf16.mxu0 %v2647
        %2709 = vmatpush1.bf16.msra.mxu0 %v2646
        %2710 = vmatprep.subr.bf16.mxu0 %v2645
        %2711 = vmatpush1.bf16.msra.mxu0 %v2644
        %2712 = vmatprep.subr.bf16.mxu0 %v2643
        %2713 = vmatpush1.bf16.msra.mxu0 %v2642
        %2714 = vmatprep.subr.bf16.mxu0 %v2641
        %2715 = vmatpush1.bf16.msra.mxu0 %v2640
        %2716 = vmatprep.subr.bf16.mxu0 %v2639
        %2717 = vmatpush1.bf16.msra.mxu0 %v2638
        %2718 = vmatprep.subr.bf16.mxu0 %v2669
        %2719 = vmatpush2.bf16.msra.mxu0 %v2668
        %2720 = vmatprep.subr.bf16.mxu0 %v2667
        %2721 = vmatpush2.bf16.msra.mxu0 %v2666
        %2722 = vmatprep.subr.bf16.mxu0 %v2665
        %2723 = vmatpush2.bf16.msra.mxu0 %v2664
        %2724 = vmatprep.subr.bf16.mxu0 %v2663
        %2725 = vmatpush2.bf16.msra.mxu0 %v2662
        %2726 = vmatprep.subr.bf16.mxu0 %v2661
        %2727 = vmatpush2.bf16.msra.mxu0 %v2660
        %2728 = vmatprep.subr.bf16.mxu0 %v2659
        %2729 = vmatpush2.bf16.msra.mxu0 %v2658
        %2730 = vmatprep.subr.bf16.mxu0 %v2657
        %2731 = vmatpush2.bf16.msra.mxu0 %v2656
        %2732 = vmatprep.subr.bf16.mxu0 %v2655
        %2733 = vmatpush2.bf16.msra.mxu0 %v2654
        %2734 = vmatprep.mubr.bf16.mxu0 %v2465
        %2735 = vmatmul.mubr.bf16.gmra.mxu0 %v2464
        %v2736 = vpop.f32.mrf.mxu0
        %v2737 = vadd.f32 %v2535, %v2736
        %v2738 = vpop.f32.mrf.mxu0
        %v2739 = vadd.f32 %v2539, %v2738
        %v2740 = vpop.f32.mrf.mxu0
        %v2741 = vadd.f32 %v2535, %v2740
        %v2742 = vpop.f32.mrf.mxu0
        %v2743 = vadd.f32 %v2539, %v2742
        %2744 = vmatprep.mubr.bf16.mxu0 %v2467
        %2745 = vmatmul.mubr.bf16.gmra.mxu0 %v2466
        %v2746 = vpop.f32.mrf.mxu0
        %v2747 = vadd.f32 %v2535, %v2746
        %v2748 = vpop.f32.mrf.mxu0
        %v2749 = vadd.f32 %v2539, %v2748
        %v2750 = vpop.f32.mrf.mxu0
        %v2751 = vadd.f32 %v2535, %v2750
        %v2752 = vpop.f32.mrf.mxu0
        %v2753 = vadd.f32 %v2539, %v2752
        %2754 = vmatprep.mubr.bf16.mxu0 %v2469
        %2755 = vmatmul.mubr.bf16.gmra.mxu0 %v2468
        %v2756 = vpop.f32.mrf.mxu0
        %v2757 = vadd.f32 %v2535, %v2756
        %v2758 = vpop.f32.mrf.mxu0
        %v2759 = vadd.f32 %v2539, %v2758
        %v2760 = vpop.f32.mrf.mxu0
        %v2761 = vadd.f32 %v2535, %v2760
        %v2762 = vpop.f32.mrf.mxu0
        %v2763 = vadd.f32 %v2539, %v2762
        %2764 = vmatprep.mubr.bf16.mxu0 %v2471
        %2765 = vmatmul.mubr.bf16.gmra.mxu0 %v2470
        %v2766 = vpop.f32.mrf.mxu0
        %v2767 = vadd.f32 %v2535, %v2766
        %v2768 = vpop.f32.mrf.mxu0
        %v2769 = vadd.f32 %v2539, %v2768
        %v2770 = vpop.f32.mrf.mxu0
        %v2771 = vadd.f32 %v2535, %v2770
        %v2772 = vpop.f32.mrf.mxu0
        %v2773 = vadd.f32 %v2539, %v2772
        %2774 = vmatprep.mubr.bf16.mxu0 %v2473
        %2775 = vmatmul.mubr.bf16.gmra.mxu0 %v2472
        %v2776 = vpop.f32.mrf.mxu0
        %v2777 = vadd.f32 %v2535, %v2776
        %v2778 = vpop.f32.mrf.mxu0
        %v2779 = vadd.f32 %v2539, %v2778
        %v2780 = vpop.f32.mrf.mxu0
        %v2781 = vadd.f32 %v2535, %v2780
        %v2782 = vpop.f32.mrf.mxu0
        %v2783 = vadd.f32 %v2539, %v2782
        %2784 = vmatprep.mubr.bf16.mxu0 %v2475
        %2785 = vmatmul.mubr.bf16.gmra.mxu0 %v2474
        %v2786 = vpop.f32.mrf.mxu0
        %v2787 = vadd.f32 %v2535, %v2786
        %v2788 = vpop.f32.mrf.mxu0
        %v2789 = vadd.f32 %v2539, %v2788
        %v2790 = vpop.f32.mrf.mxu0
        %v2791 = vadd.f32 %v2535, %v2790
        %v2792 = vpop.f32.mrf.mxu0
        %v2793 = vadd.f32 %v2539, %v2792
        %2794 = vmatprep.mubr.bf16.mxu0 %v2477
        %2795 = vmatmul.mubr.bf16.gmra.mxu0 %v2476
        %v2796 = vpop.f32.mrf.mxu0
        %v2797 = vadd.f32 %v2535, %v2796
        %v2798 = vpop.f32.mrf.mxu0
        %v2799 = vadd.f32 %v2539, %v2798
        %v2800 = vpop.f32.mrf.mxu0
        %v2801 = vadd.f32 %v2535, %v2800
        %v2802 = vpop.f32.mrf.mxu0
        %v2803 = vadd.f32 %v2539, %v2802
        %2804 = vmatprep.mubr.bf16.mxu0 %v2479
        %2805 = vmatmul.mubr.bf16.gmra.mxu0 %v2478
        %v2806 = vpop.f32.mrf.mxu0
        %v2807 = vadd.f32 %v2535, %v2806
        %v2808 = vpop.f32.mrf.mxu0
        %v2809 = vadd.f32 %v2539, %v2808
        %v2810 = vpop.f32.mrf.mxu0
        %v2811 = vadd.f32 %v2535, %v2810
        %v2812 = vpop.f32.mrf.mxu0
        %v2813 = vadd.f32 %v2539, %v2812
        %2814 = vmatprep.mubr.bf16.mxu0 %v2481
        %2815 = vmatmul.mubr.bf16.gmra.mxu0 %v2480
        %v2816 = vpop.f32.mrf.mxu0
        %v2817 = vadd.f32 %v2535, %v2816
        %v2818 = vpop.f32.mrf.mxu0
        %v2819 = vadd.f32 %v2539, %v2818
        %v2820 = vpop.f32.mrf.mxu0
        %v2821 = vadd.f32 %v2535, %v2820
        %v2822 = vpop.f32.mrf.mxu0
        %v2823 = vadd.f32 %v2539, %v2822
        %2824 = vmatprep.mubr.bf16.mxu0 %v2483
        %2825 = vmatmul.mubr.bf16.gmra.mxu0 %v2482
        %v2826 = vpop.f32.mrf.mxu0
        %v2827 = vadd.f32 %v2535, %v2826
        %v2828 = vpop.f32.mrf.mxu0
        %v2829 = vadd.f32 %v2539, %v2828
        %v2830 = vpop.f32.mrf.mxu0
        %v2831 = vadd.f32 %v2535, %v2830
        %v2832 = vpop.f32.mrf.mxu0
        %v2833 = vadd.f32 %v2539, %v2832
        %2834 = vmatprep.mubr.bf16.mxu0 %v2485
        %2835 = vmatmul.mubr.bf16.gmra.mxu0 %v2484
        %v2836 = vpop.f32.mrf.mxu0
        %v2837 = vadd.f32 %v2535, %v2836
        %v2838 = vpop.f32.mrf.mxu0
        %v2839 = vadd.f32 %v2539, %v2838
        %v2840 = vpop.f32.mrf.mxu0
        %v2841 = vadd.f32 %v2535, %v2840
        %v2842 = vpop.f32.mrf.mxu0
        %v2843 = vadd.f32 %v2539, %v2842
        %2844 = vmatprep.mubr.bf16.mxu0 %v2487
        %2845 = vmatmul.mubr.bf16.gmra.mxu0 %v2486
        %v2846 = vpop.f32.mrf.mxu0
        %v2847 = vadd.f32 %v2535, %v2846
        %v2848 = vpop.f32.mrf.mxu0
        %v2849 = vadd.f32 %v2539, %v2848
        %v2850 = vpop.f32.mrf.mxu0
        %v2851 = vadd.f32 %v2535, %v2850
        %v2852 = vpop.f32.mrf.mxu0
        %v2853 = vadd.f32 %v2539, %v2852
        %2854 = vmatprep.mubr.bf16.mxu0 %v2489
        %2855 = vmatmul.mubr.bf16.gmra.mxu0 %v2488
        %v2856 = vpop.f32.mrf.mxu0
        %v2857 = vadd.f32 %v2535, %v2856
        %v2858 = vpop.f32.mrf.mxu0
        %v2859 = vadd.f32 %v2539, %v2858
        %v2860 = vpop.f32.mrf.mxu0
        %v2861 = vadd.f32 %v2535, %v2860
        %v2862 = vpop.f32.mrf.mxu0
        %v2863 = vadd.f32 %v2539, %v2862
        %2864 = vmatprep.mubr.bf16.mxu0 %v2491
        %2865 = vmatmul.mubr.bf16.gmra.mxu0 %v2490
        %v2866 = vpop.f32.mrf.mxu0
        %v2867 = vadd.f32 %v2535, %v2866
        %v2868 = vpop.f32.mrf.mxu0
        %v2869 = vadd.f32 %v2539, %v2868
        %v2870 = vpop.f32.mrf.mxu0
        %v2871 = vadd.f32 %v2535, %v2870
        %v2872 = vpop.f32.mrf.mxu0
        %v2873 = vadd.f32 %v2539, %v2872
        %2874 = vmatprep.mubr.bf16.mxu0 %v2493
        %2875 = vmatmul.mubr.bf16.gmra.mxu0 %v2492
        %v2876 = vpop.f32.mrf.mxu0
        %v2877 = vadd.f32 %v2535, %v2876
        %v2878 = vpop.f32.mrf.mxu0
        %v2879 = vadd.f32 %v2539, %v2878
        %v2880 = vpop.f32.mrf.mxu0
        %v2881 = vadd.f32 %v2535, %v2880
        %v2882 = vpop.f32.mrf.mxu0
        %v2883 = vadd.f32 %v2539, %v2882
        %2884 = vmatprep.mubr.bf16.mxu0 %v2495
        %2885 = vmatmul.mubr.bf16.gmra.mxu0 %v2494
        %v2886 = vpop.f32.mrf.mxu0
        %v2887 = vadd.f32 %v2535, %v2886
        %v2888 = vpop.f32.mrf.mxu0
        %v2889 = vadd.f32 %v2539, %v2888
        %v2890 = vpop.f32.mrf.mxu0
        %v2891 = vadd.f32 %v2535, %v2890
        %v2892 = vpop.f32.mrf.mxu0
        %v2893 = vadd.f32 %v2539, %v2892
        %2894 = vdwg.mxu0
        %v2895 = vmax.f32 %v2737, 0.0
        %v2896 = vmax.f32 %v2739, 0.0
        %v2897 = vmax.f32 %v2741, 0.0
        %v2898 = vmax.f32 %v2743, 0.0
        %v2899 = vmax.f32 %v2747, 0.0
        %v2900 = vmax.f32 %v2749, 0.0
        %v2901 = vmax.f32 %v2751, 0.0
        %v2902 = vmax.f32 %v2753, 0.0
        %v2903 = vmax.f32 %v2757, 0.0
        %v2904 = vmax.f32 %v2759, 0.0
        %v2905 = vmax.f32 %v2761, 0.0
        %v2906 = vmax.f32 %v2763, 0.0
        %v2907 = vmax.f32 %v2767, 0.0
        %v2908 = vmax.f32 %v2769, 0.0
        %v2909 = vmax.f32 %v2771, 0.0
        %v2910 = vmax.f32 %v2773, 0.0
        %v2911 = vmax.f32 %v2777, 0.0
        %v2912 = vmax.f32 %v2779, 0.0
        %v2913 = vmax.f32 %v2781, 0.0
        %v2914 = vmax.f32 %v2783, 0.0
        %v2915 = vmax.f32 %v2787, 0.0
        %v2916 = vmax.f32 %v2789, 0.0
        %v2917 = vmax.f32 %v2791, 0.0
        %v2918 = vmax.f32 %v2793, 0.0
        %v2919 = vmax.f32 %v2797, 0.0
        %v2920 = vmax.f32 %v2799, 0.0
        %v2921 = vmax.f32 %v2801, 0.0
        %v2922 = vmax.f32 %v2803, 0.0
        %v2923 = vmax.f32 %v2807, 0.0
        %v2924 = vmax.f32 %v2809, 0.0
        %v2925 = vmax.f32 %v2811, 0.0
        %v2926 = vmax.f32 %v2813, 0.0
        %v2927 = vmax.f32 %v2817, 0.0
        %v2928 = vmax.f32 %v2819, 0.0
        %v2929 = vmax.f32 %v2821, 0.0
        %v2930 = vmax.f32 %v2823, 0.0
        %v2931 = vmax.f32 %v2827, 0.0
        %v2932 = vmax.f32 %v2829, 0.0
        %v2933 = vmax.f32 %v2831, 0.0
        %v2934 = vmax.f32 %v2833, 0.0
        %v2935 = vmax.f32 %v2837, 0.0
        %v2936 = vmax.f32 %v2839, 0.0
        %v2937 = vmax.f32 %v2841, 0.0
        %v2938 = vmax.f32 %v2843, 0.0
        %v2939 = vmax.f32 %v2847, 0.0
        %v2940 = vmax.f32 %v2849, 0.0
        %v2941 = vmax.f32 %v2851, 0.0
        %v2942 = vmax.f32 %v2853, 0.0
        %v2943 = vmax.f32 %v2857, 0.0
        %v2944 = vmax.f32 %v2859, 0.0
        %v2945 = vmax.f32 %v2861, 0.0
        %v2946 = vmax.f32 %v2863, 0.0
        %v2947 = vmax.f32 %v2867, 0.0
        %v2948 = vmax.f32 %v2869, 0.0
        %v2949 = vmax.f32 %v2871, 0.0
        %v2950 = vmax.f32 %v2873, 0.0
        %v2951 = vmax.f32 %v2877, 0.0
        %v2952 = vmax.f32 %v2879, 0.0
        %v2953 = vmax.f32 %v2881, 0.0
        %v2954 = vmax.f32 %v2883, 0.0
        %v2955 = vmax.f32 %v2887, 0.0
        %v2956 = vmax.f32 %v2889, 0.0
        %v2957 = vmax.f32 %v2891, 0.0
        %v2958 = vmax.f32 %v2893, 0.0
        %v2959 = vld [vmem:[%s6] sm:$0xff]
        %v2960 = vpack.c.bf16 %v2897, %v2895
        %v2961 = vpack.c.bf16 %v2898, %v2896
        %v2962 = vpack.c.bf16 %v2901, %v2899
        %v2963 = vpack.c.bf16 %v2902, %v2900
        %v2964 = vpack.c.bf16 %v2905, %v2903
        %v2965 = vpack.c.bf16 %v2906, %v2904
        %v2966 = vpack.c.bf16 %v2909, %v2907
        %v2967 = vpack.c.bf16 %v2910, %v2908
        %v2968 = vpack.c.bf16 %v2913, %v2911
        %v2969 = vpack.c.bf16 %v2914, %v2912
        %v2970 = vpack.c.bf16 %v2917, %v2915
        %v2971 = vpack.c.bf16 %v2918, %v2916
        %v2972 = vpack.c.bf16 %v2921, %v2919
        %v2973 = vpack.c.bf16 %v2922, %v2920
        %v2974 = vpack.c.bf16 %v2925, %v2923
        %v2975 = vpack.c.bf16 %v2926, %v2924
        %v2976 = vpack.c.bf16 %v2929, %v2927
        %v2977 = vpack.c.bf16 %v2930, %v2928
        %v2978 = vpack.c.bf16 %v2933, %v2931
        %v2979 = vpack.c.bf16 %v2934, %v2932
        %v2980 = vpack.c.bf16 %v2937, %v2935
        %v2981 = vpack.c.bf16 %v2938, %v2936
        %v2982 = vpack.c.bf16 %v2941, %v2939
        %v2983 = vpack.c.bf16 %v2942, %v2940
        %v2984 = vpack.c.bf16 %v2945, %v2943
        %v2985 = vpack.c.bf16 %v2946, %v2944
        %v2986 = vpack.c.bf16 %v2949, %v2947
        %v2987 = vpack.c.bf16 %v2950, %v2948
        %v2988 = vpack.c.bf16 %v2953, %v2951
        %v2989 = vpack.c.bf16 %v2954, %v2952
        %v2990 = vpack.c.bf16 %v2957, %v2955
        %v2991 = vpack.c.bf16 %v2958, %v2956
        %v2992 = vld [vmem:[%s7] sm:$0xff]
        %2994 = vset.pattern.permute.xlu0 0
        %2995 = vperm.xlu0 %2994, %v2992
        %v2996 = vpop.permute.xlu0 %2995
        %v2999 = vunpack.c.l.b16 %v2959
        %v3000 = vunpack.c.h.b16 %v2959
        %v3001 = vpack.c.b16 %v2999, %v2999
        %v3002 = vpack.c.b16 %v3000, %v3000
        %3005 = vmatprep.subr.bf16.mxu0 %v2975
        %3006 = vmatpush1.bf16.xpose.msra.mxu0 %v2974
        %3007 = vmatprep.subr.bf16.mxu0 %v2973
        %3008 = vmatpush1.bf16.xpose.msra.mxu0 %v2972
        %3009 = vmatprep.subr.bf16.mxu0 %v2971
        %3010 = vmatpush1.bf16.xpose.msra.mxu0 %v2970
        %3011 = vmatprep.subr.bf16.mxu0 %v2969
        %3012 = vmatpush1.bf16.xpose.msra.mxu0 %v2968
        %3013 = vmatprep.subr.bf16.mxu0 %v2967
        %3014 = vmatpush1.bf16.xpose.msra.mxu0 %v2966
        %3015 = vmatprep.subr.bf16.mxu0 %v2965
        %3016 = vmatpush1.bf16.xpose.msra.mxu0 %v2964
        %3017 = vmatprep.subr.bf16.mxu0 %v2963
        %3018 = vmatpush1.bf16.xpose.msra.mxu0 %v2962
        %3019 = vmatprep.subr.bf16.mxu0 %v2961
        %3020 = vmatpush1.bf16.xpose.msra.mxu0 %v2960
        %3021 = vmatprep.subr.bf16.mxu0 %v2991
        %3022 = vmatpush2.bf16.xpose.msra.mxu0 %v2990
        %3023 = vmatprep.subr.bf16.mxu0 %v2989
        %3024 = vmatpush2.bf16.xpose.msra.mxu0 %v2988
        %3025 = vmatprep.subr.bf16.mxu0 %v2987
        %3026 = vmatpush2.bf16.xpose.msra.mxu0 %v2986
        %3027 = vmatprep.subr.bf16.mxu0 %v2985
        %3028 = vmatpush2.bf16.xpose.msra.mxu0 %v2984
        %3029 = vmatprep.subr.bf16.mxu0 %v2983
        %3030 = vmatpush2.bf16.xpose.msra.mxu0 %v2982
        %3031 = vmatprep.subr.bf16.mxu0 %v2981
        %3032 = vmatpush2.bf16.xpose.msra.mxu0 %v2980
        %3033 = vmatprep.subr.bf16.mxu0 %v2979
        %3034 = vmatpush2.bf16.xpose.msra.mxu0 %v2978
        %3035 = vmatprep.subr.bf16.mxu0 %v2977
        %3036 = vmatpush2.bf16.xpose.msra.mxu0 %v2976
        %3037 = vmatprep.mubr.bf16.mxu0 %v3002
        %3038 = vmatmul.mubr.bf16.gmra.mxu0 %v3001
        %v3039 = vpop.f32.mrf.mxu0
        %v3040 = vadd.f32 %v2996, %v3039
        %v3041 = vpop.f32.mrf.mxu0
        %v3042 = vadd.f32 %v2996, %v3041
        %v3043 = vpop.f32.mrf.mxu0
        %v3044 = vpop.f32.mrf.mxu0
        %3045 = vdwg.mxu0
        %v3046 = vmax.f32 %v3040, -30.0
        %v3047 = vmax.f32 %v3042, -30.0
        %v3048 = vmin.f32 %v3046, 30.0
        %v3049 = vmin.f32 %v3047, 30.0
        %v3050 = vsub.f32 0.0, %v3048
        %v3051 = vsub.f32 0.0, %v3049
        %v3052 = vmul.f32 %v3050, 1.442695
        %v3053 = vpow.pop %v3052
        %v3054 = vmul.f32 %v3051, 1.442695
        %v3055 = vpow.pop %v3054
        %v3056 = vadd.f32 %v3053, 1.0
        %v3057 = vadd.f32 %v3055, 1.0
        %v3058 = vrcp.pop %v3056
        %v3059 = vrcp.pop %v3057
        %3060 = vst [vmem:[%s315] sm:$0xff] %v3058
        %3061 = vst [vmem:[%s315 + $0x8] sm:$0xff] %v3059
        %s3062 = sand.u32 %s208, 1
        %s3063 = scalar_lea.sflag [#allocation3], %s3062
        %s3064 = sand.u32 %s208, 1
        %s3065 = smul.addr %s3064, 16
        %s3066 = scalar_lea.vmem [#allocation2], %s3065
        // Predicated region
        $region53: #{tpu_custom_call.1} parent=51 // pred_check
          %p3067 = pneg %p218
        $region54: #{tpu_custom_call.1} parent=51 // pred_check_branch
          %3069 = sbr.rel (%p3067) target = $region56
        $region55: #{tpu_custom_call.1} parent=51 // pred_region
          %s3070 = smul.u32 2, %s22
          %s3072 = ssub.s32 256, 256
          %3073 = vsyncadd %s3063, %s3072
          %s3074 = smul.addr %s3070, 128
          %s3075 = scalar_lea.hbm %s8, %s3074
          %s3077 = sshll.u32 %s3066, 4
          %s3078 = int_to_ptr.vmem [resolvable:$true] %s3077
          %3080 = dma.vmem_to_hbm [thread:$0]  %s3078, 256, %s3075, %s3063
        $region56: #{tpu_custom_call.1} parent=51 // pred_fallthru
          _
      $region52: #{tpu_custom_call.1} parent=5 // pred_fallthru
        _
      %p3081 = scmp.le.s32.totalorder 2, %s17
      // Predicated region
      $region57: #{tpu_custom_call.1} parent=5 // pred_check
        %p3082 = pneg %p3081
      $region58: #{tpu_custom_call.1} parent=5 // pred_check_branch
        %3084 = sbr.rel (%p3082) target = $region60
      $region59: #{tpu_custom_call.1} parent=5 // pred_region
        %s3085 = ssub.s32 %s17, 2
        // Predicated region
        $region61: #{tpu_custom_call.1} parent=59 // pred_check
          %p3086 = pneg %p224
        $region62: #{tpu_custom_call.1} parent=59 // pred_check_branch
          %3088 = sbr.rel (%p3086) target = $region64
        $region63: #{tpu_custom_call.1} parent=59 // pred_region
          %s3089 = sand.u32 %s209, 1
          %s3090 = scalar_lea.sflag [#allocation3], %s3089
          %s3091 = sand.u32 %s209, 1
          %s3092 = smul.addr %s3091, 16
          %s3093 = scalar_lea.vmem [#allocation2], %s3092
          %3094 = dma.done %s3090, 256
        $region64: #{tpu_custom_call.1} parent=59 // pred_fallthru
          _
      $region60: #{tpu_custom_call.1} parent=5 // pred_fallthru
        _
    $region6: #{tpu_custom_call.1} parent=1 // loop_footer
      %s21 = sadd.s32 1, %s17
    $region7: #{tpu_custom_call.1} parent=1 // loop_footer_branch
      %16 = sbr.rel target = $region3
    $region8: #{tpu_custom_call.1} parent=1 // loop_exit
      _
    %3095 = vsyncpa [#allocation3], 1
    %s3096 = scalar_lea.sflag [#allocation3], 1
    %3097 = vsyncpa %s3096, 1

</llo_original>
